<compile_context>
chip_gen: v6e
topology: v6e:2x2x1
jax: 0.10.0
libtpu: 0.0.40
codegen_flags: <defaults>
</compile_context>

<pallas_src>
import jax
import jax.numpy as jnp
import numpy as np
from jax import lax
from jax.experimental import pallas as pl
from jax.experimental.pallas import tpu as pltpu


def _encoder_kernel(inp_ref, sx_ref, w_h_ref, w_c_ref, w_cat_ref, b_ref, out_ref):
    """Single-invocation recurrent encoder kernel.

    inp_ref  : (T-1, B, N)   time-major driving series
    sx_ref   : (B, N)        precomputed  w_x . inp[b, :, n] + attn_bias
    w_h_ref  : (1, H)        attention weights on hidden state
    w_c_ref  : (1, H)        attention weights on cell state
    w_cat_ref: (N+H, 4H)     fused [W_ih^T ; W_hh^T]
    b_ref    : (1, 4H)       b_ih + b_hh
    out_ref  : (T-1, B, N+H) packed [weighted_input | hidden]
    """
    Tm1, B, N = inp_ref.shape
    H = w_h_ref.shape[1]

    # Loop-invariant operands: load once, live in vregs across the recurrence.
    s_x = sx_ref[...]                  # (B, N)
    w_h = w_h_ref[...]                 # (1, H)
    w_c = w_c_ref[...]                 # (1, H)
    w_cat = w_cat_ref[...]             # (N+H, 4H)
    b = b_ref[...]                     # (1, 4H)

    def step(t, carry):
        h, c = carry                                              # (B, H) each

        # ---- input attention -------------------------------------------
        # score[b, n] = w_h.h_b + w_c.c_b + w_x.inp[b, :, n] + bias
        s_hc = jnp.sum(h * w_h + c * w_c, axis=1, keepdims=True)  # (B, 1)
        scores = s_x + s_hc                                       # (B, N)
        scores = scores - jnp.max(scores, axis=1, keepdims=True)  # softmax(dim=1)
        e = jnp.exp(scores)
        attn = e / jnp.sum(e, axis=1, keepdims=True)              # (B, N)

        w_in = attn * inp_ref[t]                                  # weighted_input

        # ---- fused single LSTM cell step (PyTorch gate order i, f, g, o) ----
        xh = jnp.concatenate([w_in, h], axis=1)                   # (B, N+H)
        gates = jnp.dot(xh, w_cat,
                        preferred_element_type=jnp.float32) + b   # (B, 4H)
        i_g = jax.nn.sigmoid(gates[:, 0:H])
        f_g = jax.nn.sigmoid(gates[:, H:2 * H])
        g_g = jnp.tanh(gates[:, 2 * H:3 * H])
        o_g = jax.nn.sigmoid(gates[:, 3 * H:4 * H])
        c_new = f_g * c + i_g * g_g
        h_new = o_g * jnp.tanh(c_new)

        # one packed (lane-denser) store per step into the VMEM-resident output;
        # the HBM writeback happens once for the whole block at kernel exit.
        out_ref[t] = jnp.concatenate([w_in, h_new], axis=1)       # (B, N+H)
        return h_new, c_new

    h0 = jnp.zeros((B, H), jnp.float32)   # init_hidden: zero hidden / cell state
    c0 = jnp.zeros((B, H), jnp.float32)
    lax.fori_loop(0, Tm1, step, (h0, c0), unroll=True)


def encoder_forward(input_data, attn_w, attn_b, w_ih, w_hh, b_ih, b_hh, hidden_size):
    """input_data: (B, T-1, N) float32.  Returns (input_weighted, input_encoded)."""
    B, Tm1, N = input_data.shape
    H = hidden_size

    inp = input_data.astype(jnp.float32)
    inp_tm = jnp.transpose(inp, (1, 0, 2))                 # (T-1, B, N) time-major

    # split attn_linear weight (1, 2H + T-1) into hidden / cell / series parts
    w_h = attn_w[:, 0:H].reshape(1, H)
    w_c = attn_w[:, H:2 * H].reshape(1, H)
    w_x = attn_w[0, 2 * H:]                                # (T-1,)
    # time-invariant series attention term (hoisted out of the recurrent loop)
    s_x = jnp.einsum('btn,t->bn', inp, w_x) + attn_b.reshape(1, 1)   # (B, N)

    # fused LSTM weights:  [w_in, h] @ [W_ih^T ; W_hh^T] == w_in@W_ih^T + h@W_hh^T
    w_cat = jnp.concatenate([jnp.transpose(w_ih), jnp.transpose(w_hh)], axis=0)  # (N+H, 4H)
    b_sum = (b_ih + b_hh).reshape(1, 4 * H)

    packed = pl.pallas_call(
        _encoder_kernel,
        out_shape=jax.ShapeDtypeStruct((Tm1, B, N + H), jnp.float32),
        in_specs=[pl.BlockSpec(memory_space=pltpu.MemorySpace.VMEM)] * 6,
        out_specs=pl.BlockSpec(memory_space=pltpu.MemorySpace.VMEM),
    )(inp_tm, s_x, w_h, w_c, w_cat, b_sum)

    input_weighted = jnp.transpose(packed[:, :, 0:N], (1, 0, 2))   # (B, T-1, N)
    input_encoded = jnp.transpose(packed[:, :, N:], (1, 0, 2))     # (B, T-1, H)
    return input_weighted, input_encoded


def ref_forward(inp, attn_w, attn_b, w_ih, w_hh, b_ih, b_hh, H):
    """Pure-JAX transliteration of the PyTorch forward (for verification)."""
    B, Tm1, N = inp.shape
    h = jnp.zeros((B, H), jnp.float32)
    c = jnp.zeros((B, H), jnp.float32)
    iw_list, ie_list = [], []
    for t in range(Tm1):
        hr = jnp.broadcast_to(h[:, None, :], (B, N, H))
        cr = jnp.broadcast_to(c[:, None, :], (B, N, H))
        xp = jnp.transpose(inp, (0, 2, 1))
        xcat = jnp.concatenate([hr, cr, xp], axis=2).reshape(-1, 2 * H + Tm1)
        scores = (xcat @ attn_w.T + attn_b).reshape(B, N)
        attn = jax.nn.softmax(scores, axis=1)
        wi = attn * inp[:, t, :]
        gates = wi @ w_ih.T + b_ih + h @ w_hh.T + b_hh
        i_g = jax.nn.sigmoid(gates[:, :H])
        f_g = jax.nn.sigmoid(gates[:, H:2 * H])
        g_g = jnp.tanh(gates[:, 2 * H:3 * H])
        o_g = jax.nn.sigmoid(gates[:, 3 * H:])
        c = f_g * c + i_g * g_g
        h = o_g * jnp.tanh(c)
        iw_list.append(wi)
        ie_list.append(h)
    return jnp.stack(iw_list, axis=1), jnp.stack(ie_list, axis=1)


if __name__ == "__main__":
    # small shapes consistent with the module's forward
    B, N, H, T = 2, 8, 16, 10          # batch, input_size, hidden_size, T
    Tm1 = T - 1

    key = jax.random.PRNGKey(0)
    k_inp, k1, k2, k3, k4, k5, k6 = jax.random.split(key, 7)
    input_data = jax.random.normal(k_inp, (B, Tm1, N), dtype=jnp.float32)

    # deterministic parameter init (PyTorch-style uniform bounds)
    bl = 1.0 / np.sqrt(H)
    w_ih = jax.random.uniform(k1, (4 * H, N), minval=-bl, maxval=bl, dtype=jnp.float32)
    w_hh = jax.random.uniform(k2, (4 * H, H), minval=-bl, maxval=bl, dtype=jnp.float32)
    b_ih = jax.random.uniform(k3, (4 * H,), minval=-bl, maxval=bl, dtype=jnp.float32)
    b_hh = jax.random.uniform(k4, (4 * H,), minval=-bl, maxval=bl, dtype=jnp.float32)
    ba = 1.0 / np.sqrt(2 * H + Tm1)
    attn_w = jax.random.uniform(k5, (1, 2 * H + Tm1), minval=-ba, maxval=ba, dtype=jnp.float32)
    attn_b = jax.random.uniform(k6, (1,), minval=-ba, maxval=ba, dtype=jnp.float32)

    iw, ie = encoder_forward(input_data, attn_w, attn_b, w_ih, w_hh, b_ih, b_hh, H)
    jax.block_until_ready((iw, ie))

    assert iw.shape == (B, Tm1, N) and ie.shape == (B, Tm1, H)
    iw_ref, ie_ref = ref_forward(input_data, attn_w, attn_b, w_ih, w_hh, b_ih, b_hh, H)
    np.testing.assert_allclose(np.asarray(iw), np.asarray(iw_ref), atol=1e-3, rtol=1e-3)
    np.testing.assert_allclose(np.asarray(ie), np.asarray(ie_ref), atol=1e-3, rtol=1e-3)

    print("KERNEL_OK")
</pallas_src>

<mosaic_0001>
module attributes {stable_mosaic.version = 11 : i64} {
  func.func @_encoder_kernel(%arg0: memref<9x2x8xf32, #tpu.memory_space<vmem>>, %arg1: memref<2x8xf32, #tpu.memory_space<vmem>>, %arg2: memref<1x16xf32, #tpu.memory_space<vmem>>, %arg3: memref<1x16xf32, #tpu.memory_space<vmem>>, %arg4: memref<24x64xf32, #tpu.memory_space<vmem>>, %arg5: memref<1x64xf32, #tpu.memory_space<vmem>>, %arg6: memref<9x2x24xf32, #tpu.memory_space<vmem>>) attributes {dimension_semantics = [], scalar_prefetch = 0 : i64, scratch_operands = 0 : i64, tpu.core_type = #tpu.core_type<tc>} {
    %c0 = arith.constant 0 : index
    %c0_0 = arith.constant 0 : index
    %0 = vector.load %arg1[%c0, %c0_0] : memref<2x8xf32, #tpu.memory_space<vmem>>, vector<2x8xf32>
    %c0_1 = arith.constant 0 : index
    %c0_2 = arith.constant 0 : index
    %1 = vector.load %arg2[%c0_1, %c0_2] : memref<1x16xf32, #tpu.memory_space<vmem>>, vector<1x16xf32>
    %c0_3 = arith.constant 0 : index
    %c0_4 = arith.constant 0 : index
    %2 = vector.load %arg3[%c0_3, %c0_4] : memref<1x16xf32, #tpu.memory_space<vmem>>, vector<1x16xf32>
    %c0_5 = arith.constant 0 : index
    %c0_6 = arith.constant 0 : index
    %3 = vector.load %arg4[%c0_5, %c0_6] : memref<24x64xf32, #tpu.memory_space<vmem>>, vector<24x64xf32>
    %c0_7 = arith.constant 0 : index
    %c0_8 = arith.constant 0 : index
    %4 = vector.load %arg5[%c0_7, %c0_8] : memref<1x64xf32, #tpu.memory_space<vmem>>, vector<1x64xf32>
    %cst = arith.constant 0.000000e+00 : f32
    %5 = vector.broadcast %cst : f32 to vector<2x16xf32>
    %cst_9 = arith.constant 0.000000e+00 : f32
    %6 = vector.broadcast %cst_9 : f32 to vector<2x16xf32>
    %c0_i32 = arith.constant 0 : i32
    %7 = vector.broadcast %1 : vector<1x16xf32> to vector<2x16xf32>
    %8 = arith.mulf %5, %7 : vector<2x16xf32>
    %9 = vector.broadcast %2 : vector<1x16xf32> to vector<2x16xf32>
    %10 = arith.mulf %6, %9 : vector<2x16xf32>
    %11 = arith.addf %8, %10 : vector<2x16xf32>
    %cst_10 = arith.constant dense<0.000000e+00> : vector<2xf32>
    %12 = vector.multi_reduction <add>, %11, %cst_10 [1] : vector<2x16xf32> to vector<2xf32>
    %13 = vector.shape_cast %12 : vector<2xf32> to vector<2x1xf32>
    %14 = vector.broadcast %13 : vector<2x1xf32> to vector<2x8xf32>
    %15 = arith.addf %0, %14 : vector<2x8xf32>
    %cst_11 = arith.constant dense<0xFF800000> : vector<2xf32>
    %16 = vector.multi_reduction <maximumf>, %15, %cst_11 [1] : vector<2x8xf32> to vector<2xf32>
    %17 = vector.shape_cast %16 : vector<2xf32> to vector<2x1xf32>
    %18 = vector.broadcast %17 : vector<2x1xf32> to vector<2x8xf32>
    %19 = arith.subf %15, %18 : vector<2x8xf32>
    %20 = math.exp %19 : vector<2x8xf32>
    %cst_12 = arith.constant dense<0.000000e+00> : vector<2xf32>
    %21 = vector.multi_reduction <add>, %20, %cst_12 [1] : vector<2x8xf32> to vector<2xf32>
    %22 = vector.shape_cast %21 : vector<2xf32> to vector<2x1xf32>
    %23 = vector.broadcast %22 : vector<2x1xf32> to vector<2x8xf32>
    %24 = arith.divf %20, %23 : vector<2x8xf32>
    %25 = arith.index_cast %c0_i32 : i32 to index
    %c0_13 = arith.constant 0 : index
    %c0_14 = arith.constant 0 : index
    %26 = vector.load %arg0[%25, %c0_13, %c0_14] : memref<9x2x8xf32, #tpu.memory_space<vmem>>, vector<1x2x8xf32>
    %27 = vector.shape_cast %26 : vector<1x2x8xf32> to vector<2x8xf32>
    %28 = arith.mulf %24, %27 : vector<2x8xf32>
    %29 = tpu.concatenate %28, %5 in 1 : vector<2x8xf32>, vector<2x16xf32> -> vector<2x24xf32>
    %cst_15 = arith.constant dense<0.000000e+00> : vector<2x64xf32>
    %30 = tpu.matmul %29, %3, %cst_15 {dimension_numbers = #tpu.dot_dimension_numbers<[1], [0], [0], [1], [0, 0, 1, 1], [], []>} : vector<2x24xf32>, vector<24x64xf32>, vector<2x64xf32> -> vector<2x64xf32>
    %31 = vector.broadcast %4 : vector<1x64xf32> to vector<2x64xf32>
    %32 = arith.addf %30, %31 : vector<2x64xf32>
    %33 = vector.extract_strided_slice %32 {offsets = [0, 0], sizes = [2, 16], strides = [1, 1]} : vector<2x64xf32> to vector<2x16xf32>
    %34 = arith.negf %33 : vector<2x16xf32>
    %35 = math.exp %34 : vector<2x16xf32>
    %cst_16 = arith.constant 1.000000e+00 : f32
    %36 = vector.broadcast %cst_16 : f32 to vector<2x16xf32>
    %37 = arith.addf %36, %35 : vector<2x16xf32>
    %38 = arith.divf %36, %37 : vector<2x16xf32>
    %39 = vector.extract_strided_slice %32 {offsets = [0, 16], sizes = [2, 16], strides = [1, 1]} : vector<2x64xf32> to vector<2x16xf32>
    %40 = arith.negf %39 : vector<2x16xf32>
    %41 = math.exp %40 : vector<2x16xf32>
    %cst_17 = arith.constant 1.000000e+00 : f32
    %42 = vector.broadcast %cst_17 : f32 to vector<2x16xf32>
    %43 = arith.addf %42, %41 : vector<2x16xf32>
    %44 = arith.divf %42, %43 : vector<2x16xf32>
    %45 = vector.extract_strided_slice %32 {offsets = [0, 32], sizes = [2, 16], strides = [1, 1]} : vector<2x64xf32> to vector<2x16xf32>
    %46 = math.tanh %45 : vector<2x16xf32>
    %47 = vector.extract_strided_slice %32 {offsets = [0, 48], sizes = [2, 16], strides = [1, 1]} : vector<2x64xf32> to vector<2x16xf32>
    %48 = arith.negf %47 : vector<2x16xf32>
    %49 = math.exp %48 : vector<2x16xf32>
    %cst_18 = arith.constant 1.000000e+00 : f32
    %50 = vector.broadcast %cst_18 : f32 to vector<2x16xf32>
    %51 = arith.addf %50, %49 : vector<2x16xf32>
    %52 = arith.divf %50, %51 : vector<2x16xf32>
    %53 = arith.mulf %44, %6 : vector<2x16xf32>
    %54 = arith.mulf %38, %46 : vector<2x16xf32>
    %55 = arith.addf %53, %54 : vector<2x16xf32>
    %56 = math.tanh %55 : vector<2x16xf32>
    %57 = arith.mulf %52, %56 : vector<2x16xf32>
    %58 = tpu.concatenate %28, %57 in 1 : vector<2x8xf32>, vector<2x16xf32> -> vector<2x24xf32>
    %59 = arith.index_cast %c0_i32 : i32 to index
    %c0_19 = arith.constant 0 : index
    %c0_20 = arith.constant 0 : index
    %60 = vector.load %arg6[%59, %c0_19, %c0_20] : memref<9x2x24xf32, #tpu.memory_space<vmem>>, vector<1x2x24xf32>
    %61 = vector.shape_cast %60 : vector<1x2x24xf32> to vector<2x24xf32>
    %62 = vector.shape_cast %58 : vector<2x24xf32> to vector<1x2x24xf32>
    tpu.vector_store %arg6[%59, %c0_19, %c0_20], %62 {strides = array<i32>} : memref<9x2x24xf32, #tpu.memory_space<vmem>>, vector<1x2x24xf32>,
    %c1_i32 = arith.constant 1 : i32
    %63 = vector.broadcast %1 : vector<1x16xf32> to vector<2x16xf32>
    %64 = arith.mulf %57, %63 : vector<2x16xf32>
    %65 = vector.broadcast %2 : vector<1x16xf32> to vector<2x16xf32>
    %66 = arith.mulf %55, %65 : vector<2x16xf32>
    %67 = arith.addf %64, %66 : vector<2x16xf32>
    %cst_21 = arith.constant dense<0.000000e+00> : vector<2xf32>
    %68 = vector.multi_reduction <add>, %67, %cst_21 [1] : vector<2x16xf32> to vector<2xf32>
    %69 = vector.shape_cast %68 : vector<2xf32> to vector<2x1xf32>
    %70 = vector.broadcast %69 : vector<2x1xf32> to vector<2x8xf32>
    %71 = arith.addf %0, %70 : vector<2x8xf32>
    %cst_22 = arith.constant dense<0xFF800000> : vector<2xf32>
    %72 = vector.multi_reduction <maximumf>, %71, %cst_22 [1] : vector<2x8xf32> to vector<2xf32>
    %73 = vector.shape_cast %72 : vector<2xf32> to vector<2x1xf32>
    %74 = vector.broadcast %73 : vector<2x1xf32> to vector<2x8xf32>
    %75 = arith.subf %71, %74 : vector<2x8xf32>
    %76 = math.exp %75 : vector<2x8xf32>
    %cst_23 = arith.constant dense<0.000000e+00> : vector<2xf32>
    %77 = vector.multi_reduction <add>, %76, %cst_23 [1] : vector<2x8xf32> to vector<2xf32>
    %78 = vector.shape_cast %77 : vector<2xf32> to vector<2x1xf32>
    %79 = vector.broadcast %78 : vector<2x1xf32> to vector<2x8xf32>
    %80 = arith.divf %76, %79 : vector<2x8xf32>
    %81 = arith.index_cast %c1_i32 : i32 to index
    %c0_24 = arith.constant 0 : index
    %c0_25 = arith.constant 0 : index
    %82 = vector.load %arg0[%81, %c0_24, %c0_25] : memref<9x2x8xf32, #tpu.memory_space<vmem>>, vector<1x2x8xf32>
    %83 = vector.shape_cast %82 : vector<1x2x8xf32> to vector<2x8xf32>
    %84 = arith.mulf %80, %83 : vector<2x8xf32>
    %85 = tpu.concatenate %84, %57 in 1 : vector<2x8xf32>, vector<2x16xf32> -> vector<2x24xf32>
    %cst_26 = arith.constant dense<0.000000e+00> : vector<2x64xf32>
    %86 = tpu.matmul %85, %3, %cst_26 {dimension_numbers = #tpu.dot_dimension_numbers<[1], [0], [0], [1], [0, 0, 1, 1], [], []>} : vector<2x24xf32>, vector<24x64xf32>, vector<2x64xf32> -> vector<2x64xf32>
    %87 = vector.broadcast %4 : vector<1x64xf32> to vector<2x64xf32>
    %88 = arith.addf %86, %87 : vector<2x64xf32>
    %89 = vector.extract_strided_slice %88 {offsets = [0, 0], sizes = [2, 16], strides = [1, 1]} : vector<2x64xf32> to vector<2x16xf32>
    %90 = arith.negf %89 : vector<2x16xf32>
    %91 = math.exp %90 : vector<2x16xf32>
    %cst_27 = arith.constant 1.000000e+00 : f32
    %92 = vector.broadcast %cst_27 : f32 to vector<2x16xf32>
    %93 = arith.addf %92, %91 : vector<2x16xf32>
    %94 = arith.divf %92, %93 : vector<2x16xf32>
    %95 = vector.extract_strided_slice %88 {offsets = [0, 16], sizes = [2, 16], strides = [1, 1]} : vector<2x64xf32> to vector<2x16xf32>
    %96 = arith.negf %95 : vector<2x16xf32>
    %97 = math.exp %96 : vector<2x16xf32>
    %cst_28 = arith.constant 1.000000e+00 : f32
    %98 = vector.broadcast %cst_28 : f32 to vector<2x16xf32>
    %99 = arith.addf %98, %97 : vector<2x16xf32>
    %100 = arith.divf %98, %99 : vector<2x16xf32>
    %101 = vector.extract_strided_slice %88 {offsets = [0, 32], sizes = [2, 16], strides = [1, 1]} : vector<2x64xf32> to vector<2x16xf32>
    %102 = math.tanh %101 : vector<2x16xf32>
    %103 = vector.extract_strided_slice %88 {offsets = [0, 48], sizes = [2, 16], strides = [1, 1]} : vector<2x64xf32> to vector<2x16xf32>
    %104 = arith.negf %103 : vector<2x16xf32>
    %105 = math.exp %104 : vector<2x16xf32>
    %cst_29 = arith.constant 1.000000e+00 : f32
    %106 = vector.broadcast %cst_29 : f32 to vector<2x16xf32>
    %107 = arith.addf %106, %105 : vector<2x16xf32>
    %108 = arith.divf %106, %107 : vector<2x16xf32>
    %109 = arith.mulf %100, %55 : vector<2x16xf32>
    %110 = arith.mulf %94, %102 : vector<2x16xf32>
    %111 = arith.addf %109, %110 : vector<2x16xf32>
    %112 = math.tanh %111 : vector<2x16xf32>
    %113 = arith.mulf %108, %112 : vector<2x16xf32>
    %114 = tpu.concatenate %84, %113 in 1 : vector<2x8xf32>, vector<2x16xf32> -> vector<2x24xf32>
    %115 = arith.index_cast %c1_i32 : i32 to index
    %c0_30 = arith.constant 0 : index
    %c0_31 = arith.constant 0 : index
    %116 = vector.load %arg6[%115, %c0_30, %c0_31] : memref<9x2x24xf32, #tpu.memory_space<vmem>>, vector<1x2x24xf32>
    %117 = vector.shape_cast %116 : vector<1x2x24xf32> to vector<2x24xf32>
    %118 = vector.shape_cast %114 : vector<2x24xf32> to vector<1x2x24xf32>
    tpu.vector_store %arg6[%115, %c0_30, %c0_31], %118 {strides = array<i32>} : memref<9x2x24xf32, #tpu.memory_space<vmem>>, vector<1x2x24xf32>,
    %c2_i32 = arith.constant 2 : i32
    %119 = vector.broadcast %1 : vector<1x16xf32> to vector<2x16xf32>
    %120 = arith.mulf %113, %119 : vector<2x16xf32>
    %121 = vector.broadcast %2 : vector<1x16xf32> to vector<2x16xf32>
    %122 = arith.mulf %111, %121 : vector<2x16xf32>
    %123 = arith.addf %120, %122 : vector<2x16xf32>
    %cst_32 = arith.constant dense<0.000000e+00> : vector<2xf32>
    %124 = vector.multi_reduction <add>, %123, %cst_32 [1] : vector<2x16xf32> to vector<2xf32>
    %125 = vector.shape_cast %124 : vector<2xf32> to vector<2x1xf32>
    %126 = vector.broadcast %125 : vector<2x1xf32> to vector<2x8xf32>
    %127 = arith.addf %0, %126 : vector<2x8xf32>
    %cst_33 = arith.constant dense<0xFF800000> : vector<2xf32>
    %128 = vector.multi_reduction <maximumf>, %127, %cst_33 [1] : vector<2x8xf32> to vector<2xf32>
    %129 = vector.shape_cast %128 : vector<2xf32> to vector<2x1xf32>
    %130 = vector.broadcast %129 : vector<2x1xf32> to vector<2x8xf32>
    %131 = arith.subf %127, %130 : vector<2x8xf32>
    %132 = math.exp %131 : vector<2x8xf32>
    %cst_34 = arith.constant dense<0.000000e+00> : vector<2xf32>
    %133 = vector.multi_reduction <add>, %132, %cst_34 [1] : vector<2x8xf32> to vector<2xf32>
    %134 = vector.shape_cast %133 : vector<2xf32> to vector<2x1xf32>
    %135 = vector.broadcast %134 : vector<2x1xf32> to vector<2x8xf32>
    %136 = arith.divf %132, %135 : vector<2x8xf32>
    %137 = arith.index_cast %c2_i32 : i32 to index
    %c0_35 = arith.constant 0 : index
    %c0_36 = arith.constant 0 : index
    %138 = vector.load %arg0[%137, %c0_35, %c0_36] : memref<9x2x8xf32, #tpu.memory_space<vmem>>, vector<1x2x8xf32>
    %139 = vector.shape_cast %138 : vector<1x2x8xf32> to vector<2x8xf32>
    %140 = arith.mulf %136, %139 : vector<2x8xf32>
    %141 = tpu.concatenate %140, %113 in 1 : vector<2x8xf32>, vector<2x16xf32> -> vector<2x24xf32>
    %cst_37 = arith.constant dense<0.000000e+00> : vector<2x64xf32>
    %142 = tpu.matmul %141, %3, %cst_37 {dimension_numbers = #tpu.dot_dimension_numbers<[1], [0], [0], [1], [0, 0, 1, 1], [], []>} : vector<2x24xf32>, vector<24x64xf32>, vector<2x64xf32> -> vector<2x64xf32>
    %143 = vector.broadcast %4 : vector<1x64xf32> to vector<2x64xf32>
    %144 = arith.addf %142, %143 : vector<2x64xf32>
    %145 = vector.extract_strided_slice %144 {offsets = [0, 0], sizes = [2, 16], strides = [1, 1]} : vector<2x64xf32> to vector<2x16xf32>
    %146 = arith.negf %145 : vector<2x16xf32>
    %147 = math.exp %146 : vector<2x16xf32>
    %cst_38 = arith.constant 1.000000e+00 : f32
    %148 = vector.broadcast %cst_38 : f32 to vector<2x16xf32>
    %149 = arith.addf %148, %147 : vector<2x16xf32>
    %150 = arith.divf %148, %149 : vector<2x16xf32>
    %151 = vector.extract_strided_slice %144 {offsets = [0, 16], sizes = [2, 16], strides = [1, 1]} : vector<2x64xf32> to vector<2x16xf32>
    %152 = arith.negf %151 : vector<2x16xf32>
    %153 = math.exp %152 : vector<2x16xf32>
    %cst_39 = arith.constant 1.000000e+00 : f32
    %154 = vector.broadcast %cst_39 : f32 to vector<2x16xf32>
    %155 = arith.addf %154, %153 : vector<2x16xf32>
    %156 = arith.divf %154, %155 : vector<2x16xf32>
    %157 = vector.extract_strided_slice %144 {offsets = [0, 32], sizes = [2, 16], strides = [1, 1]} : vector<2x64xf32> to vector<2x16xf32>
    %158 = math.tanh %157 : vector<2x16xf32>
    %159 = vector.extract_strided_slice %144 {offsets = [0, 48], sizes = [2, 16], strides = [1, 1]} : vector<2x64xf32> to vector<2x16xf32>
    %160 = arith.negf %159 : vector<2x16xf32>
    %161 = math.exp %160 : vector<2x16xf32>
    %cst_40 = arith.constant 1.000000e+00 : f32
    %162 = vector.broadcast %cst_40 : f32 to vector<2x16xf32>
    %163 = arith.addf %162, %161 : vector<2x16xf32>
    %164 = arith.divf %162, %163 : vector<2x16xf32>
    %165 = arith.mulf %156, %111 : vector<2x16xf32>
    %166 = arith.mulf %150, %158 : vector<2x16xf32>
    %167 = arith.addf %165, %166 : vector<2x16xf32>
    %168 = math.tanh %167 : vector<2x16xf32>
    %169 = arith.mulf %164, %168 : vector<2x16xf32>
    %170 = tpu.concatenate %140, %169 in 1 : vector<2x8xf32>, vector<2x16xf32> -> vector<2x24xf32>
    %171 = arith.index_cast %c2_i32 : i32 to index
    %c0_41 = arith.constant 0 : index
    %c0_42 = arith.constant 0 : index
    %172 = vector.load %arg6[%171, %c0_41, %c0_42] : memref<9x2x24xf32, #tpu.memory_space<vmem>>, vector<1x2x24xf32>
    %173 = vector.shape_cast %172 : vector<1x2x24xf32> to vector<2x24xf32>
    %174 = vector.shape_cast %170 : vector<2x24xf32> to vector<1x2x24xf32>
    tpu.vector_store %arg6[%171, %c0_41, %c0_42], %174 {strides = array<i32>} : memref<9x2x24xf32, #tpu.memory_space<vmem>>, vector<1x2x24xf32>,
    %c3_i32 = arith.constant 3 : i32
    %175 = vector.broadcast %1 : vector<1x16xf32> to vector<2x16xf32>
    %176 = arith.mulf %169, %175 : vector<2x16xf32>
    %177 = vector.broadcast %2 : vector<1x16xf32> to vector<2x16xf32>
    %178 = arith.mulf %167, %177 : vector<2x16xf32>
    %179 = arith.addf %176, %178 : vector<2x16xf32>
    %cst_43 = arith.constant dense<0.000000e+00> : vector<2xf32>
    %180 = vector.multi_reduction <add>, %179, %cst_43 [1] : vector<2x16xf32> to vector<2xf32>
    %181 = vector.shape_cast %180 : vector<2xf32> to vector<2x1xf32>
    %182 = vector.broadcast %181 : vector<2x1xf32> to vector<2x8xf32>
    %183 = arith.addf %0, %182 : vector<2x8xf32>
    %cst_44 = arith.constant dense<0xFF800000> : vector<2xf32>
    %184 = vector.multi_reduction <maximumf>, %183, %cst_44 [1] : vector<2x8xf32> to vector<2xf32>
    %185 = vector.shape_cast %184 : vector<2xf32> to vector<2x1xf32>
    %186 = vector.broadcast %185 : vector<2x1xf32> to vector<2x8xf32>
    %187 = arith.subf %183, %186 : vector<2x8xf32>
    %188 = math.exp %187 : vector<2x8xf32>
    %cst_45 = arith.constant dense<0.000000e+00> : vector<2xf32>
    %189 = vector.multi_reduction <add>, %188, %cst_45 [1] : vector<2x8xf32> to vector<2xf32>
    %190 = vector.shape_cast %189 : vector<2xf32> to vector<2x1xf32>
    %191 = vector.broadcast %190 : vector<2x1xf32> to vector<2x8xf32>
    %192 = arith.divf %188, %191 : vector<2x8xf32>
    %193 = arith.index_cast %c3_i32 : i32 to index
    %c0_46 = arith.constant 0 : index
    %c0_47 = arith.constant 0 : index
    %194 = vector.load %arg0[%193, %c0_46, %c0_47] : memref<9x2x8xf32, #tpu.memory_space<vmem>>, vector<1x2x8xf32>
    %195 = vector.shape_cast %194 : vector<1x2x8xf32> to vector<2x8xf32>
    %196 = arith.mulf %192, %195 : vector<2x8xf32>
    %197 = tpu.concatenate %196, %169 in 1 : vector<2x8xf32>, vector<2x16xf32> -> vector<2x24xf32>
    %cst_48 = arith.constant dense<0.000000e+00> : vector<2x64xf32>
    %198 = tpu.matmul %197, %3, %cst_48 {dimension_numbers = #tpu.dot_dimension_numbers<[1], [0], [0], [1], [0, 0, 1, 1], [], []>} : vector<2x24xf32>, vector<24x64xf32>, vector<2x64xf32> -> vector<2x64xf32>
    %199 = vector.broadcast %4 : vector<1x64xf32> to vector<2x64xf32>
    %200 = arith.addf %198, %199 : vector<2x64xf32>
    %201 = vector.extract_strided_slice %200 {offsets = [0, 0], sizes = [2, 16], strides = [1, 1]} : vector<2x64xf32> to vector<2x16xf32>
    %202 = arith.negf %201 : vector<2x16xf32>
    %203 = math.exp %202 : vector<2x16xf32>
    %cst_49 = arith.constant 1.000000e+00 : f32
    %204 = vector.broadcast %cst_49 : f32 to vector<2x16xf32>
    %205 = arith.addf %204, %203 : vector<2x16xf32>
    %206 = arith.divf %204, %205 : vector<2x16xf32>
    %207 = vector.extract_strided_slice %200 {offsets = [0, 16], sizes = [2, 16], strides = [1, 1]} : vector<2x64xf32> to vector<2x16xf32>
    %208 = arith.negf %207 : vector<2x16xf32>
    %209 = math.exp %208 : vector<2x16xf32>
    %cst_50 = arith.constant 1.000000e+00 : f32
    %210 = vector.broadcast %cst_50 : f32 to vector<2x16xf32>
    %211 = arith.addf %210, %209 : vector<2x16xf32>
    %212 = arith.divf %210, %211 : vector<2x16xf32>
    %213 = vector.extract_strided_slice %200 {offsets = [0, 32], sizes = [2, 16], strides = [1, 1]} : vector<2x64xf32> to vector<2x16xf32>
    %214 = math.tanh %213 : vector<2x16xf32>
    %215 = vector.extract_strided_slice %200 {offsets = [0, 48], sizes = [2, 16], strides = [1, 1]} : vector<2x64xf32> to vector<2x16xf32>
    %216 = arith.negf %215 : vector<2x16xf32>
    %217 = math.exp %216 : vector<2x16xf32>
    %cst_51 = arith.constant 1.000000e+00 : f32
    %218 = vector.broadcast %cst_51 : f32 to vector<2x16xf32>
    %219 = arith.addf %218, %217 : vector<2x16xf32>
    %220 = arith.divf %218, %219 : vector<2x16xf32>
    %221 = arith.mulf %212, %167 : vector<2x16xf32>
    %222 = arith.mulf %206, %214 : vector<2x16xf32>
    %223 = arith.addf %221, %222 : vector<2x16xf32>
    %224 = math.tanh %223 : vector<2x16xf32>
    %225 = arith.mulf %220, %224 : vector<2x16xf32>
    %226 = tpu.concatenate %196, %225 in 1 : vector<2x8xf32>, vector<2x16xf32> -> vector<2x24xf32>
    %227 = arith.index_cast %c3_i32 : i32 to index
    %c0_52 = arith.constant 0 : index
    %c0_53 = arith.constant 0 : index
    %228 = vector.load %arg6[%227, %c0_52, %c0_53] : memref<9x2x24xf32, #tpu.memory_space<vmem>>, vector<1x2x24xf32>
    %229 = vector.shape_cast %228 : vector<1x2x24xf32> to vector<2x24xf32>
    %230 = vector.shape_cast %226 : vector<2x24xf32> to vector<1x2x24xf32>
    tpu.vector_store %arg6[%227, %c0_52, %c0_53], %230 {strides = array<i32>} : memref<9x2x24xf32, #tpu.memory_space<vmem>>, vector<1x2x24xf32>,
    %c4_i32 = arith.constant 4 : i32
    %231 = vector.broadcast %1 : vector<1x16xf32> to vector<2x16xf32>
    %232 = arith.mulf %225, %231 : vector<2x16xf32>
    %233 = vector.broadcast %2 : vector<1x16xf32> to vector<2x16xf32>
    %234 = arith.mulf %223, %233 : vector<2x16xf32>
    %235 = arith.addf %232, %234 : vector<2x16xf32>
    %cst_54 = arith.constant dense<0.000000e+00> : vector<2xf32>
    %236 = vector.multi_reduction <add>, %235, %cst_54 [1] : vector<2x16xf32> to vector<2xf32>
    %237 = vector.shape_cast %236 : vector<2xf32> to vector<2x1xf32>
    %238 = vector.broadcast %237 : vector<2x1xf32> to vector<2x8xf32>
    %239 = arith.addf %0, %238 : vector<2x8xf32>
    %cst_55 = arith.constant dense<0xFF800000> : vector<2xf32>
    %240 = vector.multi_reduction <maximumf>, %239, %cst_55 [1] : vector<2x8xf32> to vector<2xf32>
    %241 = vector.shape_cast %240 : vector<2xf32> to vector<2x1xf32>
    %242 = vector.broadcast %241 : vector<2x1xf32> to vector<2x8xf32>
    %243 = arith.subf %239, %242 : vector<2x8xf32>
    %244 = math.exp %243 : vector<2x8xf32>
    %cst_56 = arith.constant dense<0.000000e+00> : vector<2xf32>
    %245 = vector.multi_reduction <add>, %244, %cst_56 [1] : vector<2x8xf32> to vector<2xf32>
    %246 = vector.shape_cast %245 : vector<2xf32> to vector<2x1xf32>
    %247 = vector.broadcast %246 : vector<2x1xf32> to vector<2x8xf32>
    %248 = arith.divf %244, %247 : vector<2x8xf32>
    %249 = arith.index_cast %c4_i32 : i32 to index
    %c0_57 = arith.constant 0 : index
    %c0_58 = arith.constant 0 : index
    %250 = vector.load %arg0[%249, %c0_57, %c0_58] : memref<9x2x8xf32, #tpu.memory_space<vmem>>, vector<1x2x8xf32>
    %251 = vector.shape_cast %250 : vector<1x2x8xf32> to vector<2x8xf32>
    %252 = arith.mulf %248, %251 : vector<2x8xf32>
    %253 = tpu.concatenate %252, %225 in 1 : vector<2x8xf32>, vector<2x16xf32> -> vector<2x24xf32>
    %cst_59 = arith.constant dense<0.000000e+00> : vector<2x64xf32>
    %254 = tpu.matmul %253, %3, %cst_59 {dimension_numbers = #tpu.dot_dimension_numbers<[1], [0], [0], [1], [0, 0, 1, 1], [], []>} : vector<2x24xf32>, vector<24x64xf32>, vector<2x64xf32> -> vector<2x64xf32>
    %255 = vector.broadcast %4 : vector<1x64xf32> to vector<2x64xf32>
    %256 = arith.addf %254, %255 : vector<2x64xf32>
    %257 = vector.extract_strided_slice %256 {offsets = [0, 0], sizes = [2, 16], strides = [1, 1]} : vector<2x64xf32> to vector<2x16xf32>
    %258 = arith.negf %257 : vector<2x16xf32>
    %259 = math.exp %258 : vector<2x16xf32>
    %cst_60 = arith.constant 1.000000e+00 : f32
    %260 = vector.broadcast %cst_60 : f32 to vector<2x16xf32>
    %261 = arith.addf %260, %259 : vector<2x16xf32>
    %262 = arith.divf %260, %261 : vector<2x16xf32>
    %263 = vector.extract_strided_slice %256 {offsets = [0, 16], sizes = [2, 16], strides = [1, 1]} : vector<2x64xf32> to vector<2x16xf32>
    %264 = arith.negf %263 : vector<2x16xf32>
    %265 = math.exp %264 : vector<2x16xf32>
    %cst_61 = arith.constant 1.000000e+00 : f32
    %266 = vector.broadcast %cst_61 : f32 to vector<2x16xf32>
    %267 = arith.addf %266, %265 : vector<2x16xf32>
    %268 = arith.divf %266, %267 : vector<2x16xf32>
    %269 = vector.extract_strided_slice %256 {offsets = [0, 32], sizes = [2, 16], strides = [1, 1]} : vector<2x64xf32> to vector<2x16xf32>
    %270 = math.tanh %269 : vector<2x16xf32>
    %271 = vector.extract_strided_slice %256 {offsets = [0, 48], sizes = [2, 16], strides = [1, 1]} : vector<2x64xf32> to vector<2x16xf32>
    %272 = arith.negf %271 : vector<2x16xf32>
    %273 = math.exp %272 : vector<2x16xf32>
    %cst_62 = arith.constant 1.000000e+00 : f32
    %274 = vector.broadcast %cst_62 : f32 to vector<2x16xf32>
    %275 = arith.addf %274, %273 : vector<2x16xf32>
    %276 = arith.divf %274, %275 : vector<2x16xf32>
    %277 = arith.mulf %268, %223 : vector<2x16xf32>
    %278 = arith.mulf %262, %270 : vector<2x16xf32>
    %279 = arith.addf %277, %278 : vector<2x16xf32>
    %280 = math.tanh %279 : vector<2x16xf32>
    %281 = arith.mulf %276, %280 : vector<2x16xf32>
    %282 = tpu.concatenate %252, %281 in 1 : vector<2x8xf32>, vector<2x16xf32> -> vector<2x24xf32>
    %283 = arith.index_cast %c4_i32 : i32 to index
    %c0_63 = arith.constant 0 : index
    %c0_64 = arith.constant 0 : index
    %284 = vector.load %arg6[%283, %c0_63, %c0_64] : memref<9x2x24xf32, #tpu.memory_space<vmem>>, vector<1x2x24xf32>
    %285 = vector.shape_cast %284 : vector<1x2x24xf32> to vector<2x24xf32>
    %286 = vector.shape_cast %282 : vector<2x24xf32> to vector<1x2x24xf32>
    tpu.vector_store %arg6[%283, %c0_63, %c0_64], %286 {strides = array<i32>} : memref<9x2x24xf32, #tpu.memory_space<vmem>>, vector<1x2x24xf32>,
    %c5_i32 = arith.constant 5 : i32
    %287 = vector.broadcast %1 : vector<1x16xf32> to vector<2x16xf32>
    %288 = arith.mulf %281, %287 : vector<2x16xf32>
    %289 = vector.broadcast %2 : vector<1x16xf32> to vector<2x16xf32>
    %290 = arith.mulf %279, %289 : vector<2x16xf32>
    %291 = arith.addf %288, %290 : vector<2x16xf32>
    %cst_65 = arith.constant dense<0.000000e+00> : vector<2xf32>
    %292 = vector.multi_reduction <add>, %291, %cst_65 [1] : vector<2x16xf32> to vector<2xf32>
    %293 = vector.shape_cast %292 : vector<2xf32> to vector<2x1xf32>
    %294 = vector.broadcast %293 : vector<2x1xf32> to vector<2x8xf32>
    %295 = arith.addf %0, %294 : vector<2x8xf32>
    %cst_66 = arith.constant dense<0xFF800000> : vector<2xf32>
    %296 = vector.multi_reduction <maximumf>, %295, %cst_66 [1] : vector<2x8xf32> to vector<2xf32>
    %297 = vector.shape_cast %296 : vector<2xf32> to vector<2x1xf32>
    %298 = vector.broadcast %297 : vector<2x1xf32> to vector<2x8xf32>
    %299 = arith.subf %295, %298 : vector<2x8xf32>
    %300 = math.exp %299 : vector<2x8xf32>
    %cst_67 = arith.constant dense<0.000000e+00> : vector<2xf32>
    %301 = vector.multi_reduction <add>, %300, %cst_67 [1] : vector<2x8xf32> to vector<2xf32>
    %302 = vector.shape_cast %301 : vector<2xf32> to vector<2x1xf32>
    %303 = vector.broadcast %302 : vector<2x1xf32> to vector<2x8xf32>
    %304 = arith.divf %300, %303 : vector<2x8xf32>
    %305 = arith.index_cast %c5_i32 : i32 to index
    %c0_68 = arith.constant 0 : index
    %c0_69 = arith.constant 0 : index
    %306 = vector.load %arg0[%305, %c0_68, %c0_69] : memref<9x2x8xf32, #tpu.memory_space<vmem>>, vector<1x2x8xf32>
    %307 = vector.shape_cast %306 : vector<1x2x8xf32> to vector<2x8xf32>
    %308 = arith.mulf %304, %307 : vector<2x8xf32>
    %309 = tpu.concatenate %308, %281 in 1 : vector<2x8xf32>, vector<2x16xf32> -> vector<2x24xf32>
    %cst_70 = arith.constant dense<0.000000e+00> : vector<2x64xf32>
    %310 = tpu.matmul %309, %3, %cst_70 {dimension_numbers = #tpu.dot_dimension_numbers<[1], [0], [0], [1], [0, 0, 1, 1], [], []>} : vector<2x24xf32>, vector<24x64xf32>, vector<2x64xf32> -> vector<2x64xf32>
    %311 = vector.broadcast %4 : vector<1x64xf32> to vector<2x64xf32>
    %312 = arith.addf %310, %311 : vector<2x64xf32>
    %313 = vector.extract_strided_slice %312 {offsets = [0, 0], sizes = [2, 16], strides = [1, 1]} : vector<2x64xf32> to vector<2x16xf32>
    %314 = arith.negf %313 : vector<2x16xf32>
    %315 = math.exp %314 : vector<2x16xf32>
    %cst_71 = arith.constant 1.000000e+00 : f32
    %316 = vector.broadcast %cst_71 : f32 to vector<2x16xf32>
    %317 = arith.addf %316, %315 : vector<2x16xf32>
    %318 = arith.divf %316, %317 : vector<2x16xf32>
    %319 = vector.extract_strided_slice %312 {offsets = [0, 16], sizes = [2, 16], strides = [1, 1]} : vector<2x64xf32> to vector<2x16xf32>
    %320 = arith.negf %319 : vector<2x16xf32>
    %321 = math.exp %320 : vector<2x16xf32>
    %cst_72 = arith.constant 1.000000e+00 : f32
    %322 = vector.broadcast %cst_72 : f32 to vector<2x16xf32>
    %323 = arith.addf %322, %321 : vector<2x16xf32>
    %324 = arith.divf %322, %323 : vector<2x16xf32>
    %325 = vector.extract_strided_slice %312 {offsets = [0, 32], sizes = [2, 16], strides = [1, 1]} : vector<2x64xf32> to vector<2x16xf32>
    %326 = math.tanh %325 : vector<2x16xf32>
    %327 = vector.extract_strided_slice %312 {offsets = [0, 48], sizes = [2, 16], strides = [1, 1]} : vector<2x64xf32> to vector<2x16xf32>
    %328 = arith.negf %327 : vector<2x16xf32>
    %329 = math.exp %328 : vector<2x16xf32>
    %cst_73 = arith.constant 1.000000e+00 : f32
    %330 = vector.broadcast %cst_73 : f32 to vector<2x16xf32>
    %331 = arith.addf %330, %329 : vector<2x16xf32>
    %332 = arith.divf %330, %331 : vector<2x16xf32>
    %333 = arith.mulf %324, %279 : vector<2x16xf32>
    %334 = arith.mulf %318, %326 : vector<2x16xf32>
    %335 = arith.addf %333, %334 : vector<2x16xf32>
    %336 = math.tanh %335 : vector<2x16xf32>
    %337 = arith.mulf %332, %336 : vector<2x16xf32>
    %338 = tpu.concatenate %308, %337 in 1 : vector<2x8xf32>, vector<2x16xf32> -> vector<2x24xf32>
    %339 = arith.index_cast %c5_i32 : i32 to index
    %c0_74 = arith.constant 0 : index
    %c0_75 = arith.constant 0 : index
    %340 = vector.load %arg6[%339, %c0_74, %c0_75] : memref<9x2x24xf32, #tpu.memory_space<vmem>>, vector<1x2x24xf32>
    %341 = vector.shape_cast %340 : vector<1x2x24xf32> to vector<2x24xf32>
    %342 = vector.shape_cast %338 : vector<2x24xf32> to vector<1x2x24xf32>
    tpu.vector_store %arg6[%339, %c0_74, %c0_75], %342 {strides = array<i32>} : memref<9x2x24xf32, #tpu.memory_space<vmem>>, vector<1x2x24xf32>,
    %c6_i32 = arith.constant 6 : i32
    %343 = vector.broadcast %1 : vector<1x16xf32> to vector<2x16xf32>
    %344 = arith.mulf %337, %343 : vector<2x16xf32>
    %345 = vector.broadcast %2 : vector<1x16xf32> to vector<2x16xf32>
    %346 = arith.mulf %335, %345 : vector<2x16xf32>
    %347 = arith.addf %344, %346 : vector<2x16xf32>
    %cst_76 = arith.constant dense<0.000000e+00> : vector<2xf32>
    %348 = vector.multi_reduction <add>, %347, %cst_76 [1] : vector<2x16xf32> to vector<2xf32>
    %349 = vector.shape_cast %348 : vector<2xf32> to vector<2x1xf32>
    %350 = vector.broadcast %349 : vector<2x1xf32> to vector<2x8xf32>
    %351 = arith.addf %0, %350 : vector<2x8xf32>
    %cst_77 = arith.constant dense<0xFF800000> : vector<2xf32>
    %352 = vector.multi_reduction <maximumf>, %351, %cst_77 [1] : vector<2x8xf32> to vector<2xf32>
    %353 = vector.shape_cast %352 : vector<2xf32> to vector<2x1xf32>
    %354 = vector.broadcast %353 : vector<2x1xf32> to vector<2x8xf32>
    %355 = arith.subf %351, %354 : vector<2x8xf32>
    %356 = math.exp %355 : vector<2x8xf32>
    %cst_78 = arith.constant dense<0.000000e+00> : vector<2xf32>
    %357 = vector.multi_reduction <add>, %356, %cst_78 [1] : vector<2x8xf32> to vector<2xf32>
    %358 = vector.shape_cast %357 : vector<2xf32> to vector<2x1xf32>
    %359 = vector.broadcast %358 : vector<2x1xf32> to vector<2x8xf32>
    %360 = arith.divf %356, %359 : vector<2x8xf32>
    %361 = arith.index_cast %c6_i32 : i32 to index
    %c0_79 = arith.constant 0 : index
    %c0_80 = arith.constant 0 : index
    %362 = vector.load %arg0[%361, %c0_79, %c0_80] : memref<9x2x8xf32, #tpu.memory_space<vmem>>, vector<1x2x8xf32>
    %363 = vector.shape_cast %362 : vector<1x2x8xf32> to vector<2x8xf32>
    %364 = arith.mulf %360, %363 : vector<2x8xf32>
    %365 = tpu.concatenate %364, %337 in 1 : vector<2x8xf32>, vector<2x16xf32> -> vector<2x24xf32>
    %cst_81 = arith.constant dense<0.000000e+00> : vector<2x64xf32>
    %366 = tpu.matmul %365, %3, %cst_81 {dimension_numbers = #tpu.dot_dimension_numbers<[1], [0], [0], [1], [0, 0, 1, 1], [], []>} : vector<2x24xf32>, vector<24x64xf32>, vector<2x64xf32> -> vector<2x64xf32>
    %367 = vector.broadcast %4 : vector<1x64xf32> to vector<2x64xf32>
    %368 = arith.addf %366, %367 : vector<2x64xf32>
    %369 = vector.extract_strided_slice %368 {offsets = [0, 0], sizes = [2, 16], strides = [1, 1]} : vector<2x64xf32> to vector<2x16xf32>
    %370 = arith.negf %369 : vector<2x16xf32>
    %371 = math.exp %370 : vector<2x16xf32>
    %cst_82 = arith.constant 1.000000e+00 : f32
    %372 = vector.broadcast %cst_82 : f32 to vector<2x16xf32>
    %373 = arith.addf %372, %371 : vector<2x16xf32>
    %374 = arith.divf %372, %373 : vector<2x16xf32>
    %375 = vector.extract_strided_slice %368 {offsets = [0, 16], sizes = [2, 16], strides = [1, 1]} : vector<2x64xf32> to vector<2x16xf32>
    %376 = arith.negf %375 : vector<2x16xf32>
    %377 = math.exp %376 : vector<2x16xf32>
    %cst_83 = arith.constant 1.000000e+00 : f32
    %378 = vector.broadcast %cst_83 : f32 to vector<2x16xf32>
    %379 = arith.addf %378, %377 : vector<2x16xf32>
    %380 = arith.divf %378, %379 : vector<2x16xf32>
    %381 = vector.extract_strided_slice %368 {offsets = [0, 32], sizes = [2, 16], strides = [1, 1]} : vector<2x64xf32> to vector<2x16xf32>
    %382 = math.tanh %381 : vector<2x16xf32>
    %383 = vector.extract_strided_slice %368 {offsets = [0, 48], sizes = [2, 16], strides = [1, 1]} : vector<2x64xf32> to vector<2x16xf32>
    %384 = arith.negf %383 : vector<2x16xf32>
    %385 = math.exp %384 : vector<2x16xf32>
    %cst_84 = arith.constant 1.000000e+00 : f32
    %386 = vector.broadcast %cst_84 : f32 to vector<2x16xf32>
    %387 = arith.addf %386, %385 : vector<2x16xf32>
    %388 = arith.divf %386, %387 : vector<2x16xf32>
    %389 = arith.mulf %380, %335 : vector<2x16xf32>
    %390 = arith.mulf %374, %382 : vector<2x16xf32>
    %391 = arith.addf %389, %390 : vector<2x16xf32>
    %392 = math.tanh %391 : vector<2x16xf32>
    %393 = arith.mulf %388, %392 : vector<2x16xf32>
    %394 = tpu.concatenate %364, %393 in 1 : vector<2x8xf32>, vector<2x16xf32> -> vector<2x24xf32>
    %395 = arith.index_cast %c6_i32 : i32 to index
    %c0_85 = arith.constant 0 : index
    %c0_86 = arith.constant 0 : index
    %396 = vector.load %arg6[%395, %c0_85, %c0_86] : memref<9x2x24xf32, #tpu.memory_space<vmem>>, vector<1x2x24xf32>
    %397 = vector.shape_cast %396 : vector<1x2x24xf32> to vector<2x24xf32>
    %398 = vector.shape_cast %394 : vector<2x24xf32> to vector<1x2x24xf32>
    tpu.vector_store %arg6[%395, %c0_85, %c0_86], %398 {strides = array<i32>} : memref<9x2x24xf32, #tpu.memory_space<vmem>>, vector<1x2x24xf32>,
    %c7_i32 = arith.constant 7 : i32
    %399 = vector.broadcast %1 : vector<1x16xf32> to vector<2x16xf32>
    %400 = arith.mulf %393, %399 : vector<2x16xf32>
    %401 = vector.broadcast %2 : vector<1x16xf32> to vector<2x16xf32>
    %402 = arith.mulf %391, %401 : vector<2x16xf32>
    %403 = arith.addf %400, %402 : vector<2x16xf32>
    %cst_87 = arith.constant dense<0.000000e+00> : vector<2xf32>
    %404 = vector.multi_reduction <add>, %403, %cst_87 [1] : vector<2x16xf32> to vector<2xf32>
    %405 = vector.shape_cast %404 : vector<2xf32> to vector<2x1xf32>
    %406 = vector.broadcast %405 : vector<2x1xf32> to vector<2x8xf32>
    %407 = arith.addf %0, %406 : vector<2x8xf32>
    %cst_88 = arith.constant dense<0xFF800000> : vector<2xf32>
    %408 = vector.multi_reduction <maximumf>, %407, %cst_88 [1] : vector<2x8xf32> to vector<2xf32>
    %409 = vector.shape_cast %408 : vector<2xf32> to vector<2x1xf32>
    %410 = vector.broadcast %409 : vector<2x1xf32> to vector<2x8xf32>
    %411 = arith.subf %407, %410 : vector<2x8xf32>
    %412 = math.exp %411 : vector<2x8xf32>
    %cst_89 = arith.constant dense<0.000000e+00> : vector<2xf32>
    %413 = vector.multi_reduction <add>, %412, %cst_89 [1] : vector<2x8xf32> to vector<2xf32>
    %414 = vector.shape_cast %413 : vector<2xf32> to vector<2x1xf32>
    %415 = vector.broadcast %414 : vector<2x1xf32> to vector<2x8xf32>
    %416 = arith.divf %412, %415 : vector<2x8xf32>
    %417 = arith.index_cast %c7_i32 : i32 to index
    %c0_90 = arith.constant 0 : index
    %c0_91 = arith.constant 0 : index
    %418 = vector.load %arg0[%417, %c0_90, %c0_91] : memref<9x2x8xf32, #tpu.memory_space<vmem>>, vector<1x2x8xf32>
    %419 = vector.shape_cast %418 : vector<1x2x8xf32> to vector<2x8xf32>
    %420 = arith.mulf %416, %419 : vector<2x8xf32>
    %421 = tpu.concatenate %420, %393 in 1 : vector<2x8xf32>, vector<2x16xf32> -> vector<2x24xf32>
    %cst_92 = arith.constant dense<0.000000e+00> : vector<2x64xf32>
    %422 = tpu.matmul %421, %3, %cst_92 {dimension_numbers = #tpu.dot_dimension_numbers<[1], [0], [0], [1], [0, 0, 1, 1], [], []>} : vector<2x24xf32>, vector<24x64xf32>, vector<2x64xf32> -> vector<2x64xf32>
    %423 = vector.broadcast %4 : vector<1x64xf32> to vector<2x64xf32>
    %424 = arith.addf %422, %423 : vector<2x64xf32>
    %425 = vector.extract_strided_slice %424 {offsets = [0, 0], sizes = [2, 16], strides = [1, 1]} : vector<2x64xf32> to vector<2x16xf32>
    %426 = arith.negf %425 : vector<2x16xf32>
    %427 = math.exp %426 : vector<2x16xf32>
    %cst_93 = arith.constant 1.000000e+00 : f32
    %428 = vector.broadcast %cst_93 : f32 to vector<2x16xf32>
    %429 = arith.addf %428, %427 : vector<2x16xf32>
    %430 = arith.divf %428, %429 : vector<2x16xf32>
    %431 = vector.extract_strided_slice %424 {offsets = [0, 16], sizes = [2, 16], strides = [1, 1]} : vector<2x64xf32> to vector<2x16xf32>
    %432 = arith.negf %431 : vector<2x16xf32>
    %433 = math.exp %432 : vector<2x16xf32>
    %cst_94 = arith.constant 1.000000e+00 : f32
    %434 = vector.broadcast %cst_94 : f32 to vector<2x16xf32>
    %435 = arith.addf %434, %433 : vector<2x16xf32>
    %436 = arith.divf %434, %435 : vector<2x16xf32>
    %437 = vector.extract_strided_slice %424 {offsets = [0, 32], sizes = [2, 16], strides = [1, 1]} : vector<2x64xf32> to vector<2x16xf32>
    %438 = math.tanh %437 : vector<2x16xf32>
    %439 = vector.extract_strided_slice %424 {offsets = [0, 48], sizes = [2, 16], strides = [1, 1]} : vector<2x64xf32> to vector<2x16xf32>
    %440 = arith.negf %439 : vector<2x16xf32>
    %441 = math.exp %440 : vector<2x16xf32>
    %cst_95 = arith.constant 1.000000e+00 : f32
    %442 = vector.broadcast %cst_95 : f32 to vector<2x16xf32>
    %443 = arith.addf %442, %441 : vector<2x16xf32>
    %444 = arith.divf %442, %443 : vector<2x16xf32>
    %445 = arith.mulf %436, %391 : vector<2x16xf32>
    %446 = arith.mulf %430, %438 : vector<2x16xf32>
    %447 = arith.addf %445, %446 : vector<2x16xf32>
    %448 = math.tanh %447 : vector<2x16xf32>
    %449 = arith.mulf %444, %448 : vector<2x16xf32>
    %450 = tpu.concatenate %420, %449 in 1 : vector<2x8xf32>, vector<2x16xf32> -> vector<2x24xf32>
    %451 = arith.index_cast %c7_i32 : i32 to index
    %c0_96 = arith.constant 0 : index
    %c0_97 = arith.constant 0 : index
    %452 = vector.load %arg6[%451, %c0_96, %c0_97] : memref<9x2x24xf32, #tpu.memory_space<vmem>>, vector<1x2x24xf32>
    %453 = vector.shape_cast %452 : vector<1x2x24xf32> to vector<2x24xf32>
    %454 = vector.shape_cast %450 : vector<2x24xf32> to vector<1x2x24xf32>
    tpu.vector_store %arg6[%451, %c0_96, %c0_97], %454 {strides = array<i32>} : memref<9x2x24xf32, #tpu.memory_space<vmem>>, vector<1x2x24xf32>,
    %c8_i32 = arith.constant 8 : i32
    %455 = vector.broadcast %1 : vector<1x16xf32> to vector<2x16xf32>
    %456 = arith.mulf %449, %455 : vector<2x16xf32>
    %457 = vector.broadcast %2 : vector<1x16xf32> to vector<2x16xf32>
    %458 = arith.mulf %447, %457 : vector<2x16xf32>
    %459 = arith.addf %456, %458 : vector<2x16xf32>
    %cst_98 = arith.constant dense<0.000000e+00> : vector<2xf32>
    %460 = vector.multi_reduction <add>, %459, %cst_98 [1] : vector<2x16xf32> to vector<2xf32>
    %461 = vector.shape_cast %460 : vector<2xf32> to vector<2x1xf32>
    %462 = vector.broadcast %461 : vector<2x1xf32> to vector<2x8xf32>
    %463 = arith.addf %0, %462 : vector<2x8xf32>
    %cst_99 = arith.constant dense<0xFF800000> : vector<2xf32>
    %464 = vector.multi_reduction <maximumf>, %463, %cst_99 [1] : vector<2x8xf32> to vector<2xf32>
    %465 = vector.shape_cast %464 : vector<2xf32> to vector<2x1xf32>
    %466 = vector.broadcast %465 : vector<2x1xf32> to vector<2x8xf32>
    %467 = arith.subf %463, %466 : vector<2x8xf32>
    %468 = math.exp %467 : vector<2x8xf32>
    %cst_100 = arith.constant dense<0.000000e+00> : vector<2xf32>
    %469 = vector.multi_reduction <add>, %468, %cst_100 [1] : vector<2x8xf32> to vector<2xf32>
    %470 = vector.shape_cast %469 : vector<2xf32> to vector<2x1xf32>
    %471 = vector.broadcast %470 : vector<2x1xf32> to vector<2x8xf32>
    %472 = arith.divf %468, %471 : vector<2x8xf32>
    %473 = arith.index_cast %c8_i32 : i32 to index
    %c0_101 = arith.constant 0 : index
    %c0_102 = arith.constant 0 : index
    %474 = vector.load %arg0[%473, %c0_101, %c0_102] : memref<9x2x8xf32, #tpu.memory_space<vmem>>, vector<1x2x8xf32>
    %475 = vector.shape_cast %474 : vector<1x2x8xf32> to vector<2x8xf32>
    %476 = arith.mulf %472, %475 : vector<2x8xf32>
    %477 = tpu.concatenate %476, %449 in 1 : vector<2x8xf32>, vector<2x16xf32> -> vector<2x24xf32>
    %cst_103 = arith.constant dense<0.000000e+00> : vector<2x64xf32>
    %478 = tpu.matmul %477, %3, %cst_103 {dimension_numbers = #tpu.dot_dimension_numbers<[1], [0], [0], [1], [0, 0, 1, 1], [], []>} : vector<2x24xf32>, vector<24x64xf32>, vector<2x64xf32> -> vector<2x64xf32>
    %479 = vector.broadcast %4 : vector<1x64xf32> to vector<2x64xf32>
    %480 = arith.addf %478, %479 : vector<2x64xf32>
    %481 = vector.extract_strided_slice %480 {offsets = [0, 0], sizes = [2, 16], strides = [1, 1]} : vector<2x64xf32> to vector<2x16xf32>
    %482 = arith.negf %481 : vector<2x16xf32>
    %483 = math.exp %482 : vector<2x16xf32>
    %cst_104 = arith.constant 1.000000e+00 : f32
    %484 = vector.broadcast %cst_104 : f32 to vector<2x16xf32>
    %485 = arith.addf %484, %483 : vector<2x16xf32>
    %486 = arith.divf %484, %485 : vector<2x16xf32>
    %487 = vector.extract_strided_slice %480 {offsets = [0, 16], sizes = [2, 16], strides = [1, 1]} : vector<2x64xf32> to vector<2x16xf32>
    %488 = arith.negf %487 : vector<2x16xf32>
    %489 = math.exp %488 : vector<2x16xf32>
    %cst_105 = arith.constant 1.000000e+00 : f32
    %490 = vector.broadcast %cst_105 : f32 to vector<2x16xf32>
    %491 = arith.addf %490, %489 : vector<2x16xf32>
    %492 = arith.divf %490, %491 : vector<2x16xf32>
    %493 = vector.extract_strided_slice %480 {offsets = [0, 32], sizes = [2, 16], strides = [1, 1]} : vector<2x64xf32> to vector<2x16xf32>
    %494 = math.tanh %493 : vector<2x16xf32>
    %495 = vector.extract_strided_slice %480 {offsets = [0, 48], sizes = [2, 16], strides = [1, 1]} : vector<2x64xf32> to vector<2x16xf32>
    %496 = arith.negf %495 : vector<2x16xf32>
    %497 = math.exp %496 : vector<2x16xf32>
    %cst_106 = arith.constant 1.000000e+00 : f32
    %498 = vector.broadcast %cst_106 : f32 to vector<2x16xf32>
    %499 = arith.addf %498, %497 : vector<2x16xf32>
    %500 = arith.divf %498, %499 : vector<2x16xf32>
    %501 = arith.mulf %492, %447 : vector<2x16xf32>
    %502 = arith.mulf %486, %494 : vector<2x16xf32>
    %503 = arith.addf %501, %502 : vector<2x16xf32>
    %504 = math.tanh %503 : vector<2x16xf32>
    %505 = arith.mulf %500, %504 : vector<2x16xf32>
    %506 = tpu.concatenate %476, %505 in 1 : vector<2x8xf32>, vector<2x16xf32> -> vector<2x24xf32>
    %507 = arith.index_cast %c8_i32 : i32 to index
    %c0_107 = arith.constant 0 : index
    %c0_108 = arith.constant 0 : index
    %508 = vector.load %arg6[%507, %c0_107, %c0_108] : memref<9x2x24xf32, #tpu.memory_space<vmem>>, vector<1x2x24xf32>
    %509 = vector.shape_cast %508 : vector<1x2x24xf32> to vector<2x24xf32>
    %510 = vector.shape_cast %506 : vector<2x24xf32> to vector<1x2x24xf32>
    tpu.vector_store %arg6[%507, %c0_107, %c0_108], %510 {strides = array<i32>} : memref<9x2x24xf32, #tpu.memory_space<vmem>>, vector<1x2x24xf32>,
    %c9_i32 = arith.constant 9 : i32
    return
  }
}

</mosaic_0001>

<llo_original>
// kernel: tpu_custom_call.1
$region0: #{tpu_custom_call.1}
  #allocation0 [shape = 'u32[]', space=smem, size = 0x4, offset = 0x4, fixed_abs, tag = 'smem constant byte address 0x4 - core index']
  #allocation1 [shape = 'u32[144,128]{1,0:T(1,128)}', space=vmem, size = 0x12000, scoped, tag = 'internal scratch']
  %s0 = inlined_call_operand.vmem [shape: f32[9,2,8], index: 0, kind: input, shape index: {}]
  %s1 = inlined_call_operand.vmem [shape: f32[2,8], index: 1, kind: input, shape index: {}]
  %s2 = inlined_call_operand.vmem [shape: f32[1,16], index: 2, kind: input, shape index: {}]
  %s3 = inlined_call_operand.vmem [shape: f32[1,16], index: 3, kind: input, shape index: {}]
  %s4 = inlined_call_operand.vmem [shape: f32[24,64], index: 4, kind: input, shape index: {}]
  %s5 = inlined_call_operand.vmem [shape: f32[1,64], index: 5, kind: input, shape index: {}]
  %s6 = inlined_call_operand.hbm [shape: f32[9,2,24], index: 6, kind: output, shape index: {}]
  %s7 = sld [smem:[#allocation0]]
  $region34: #{tpu_custom_call.1} parent=0
    _
  %s9 = ssub.s32 1, %s7
  %s10 = scalar_select 0, %s9, %s7
  $region1: #{tpu_custom_call.1} parent=0
    #allocation2 [shape = 'u8[9216]{0}', space=vmem, size = 0x2400, scoped, tag = 'output window, operand 0, single buffered']
    #allocation3 [shape = 's32[1]{0}', space=sflag, size = 0x4, scoped, tag = 'scoped memory for tpu_custom_call.1']
    %11 = vsyncpa [#allocation3], 0
    // Predicated region
    $region2: #{tpu_custom_call.1} parent=1 // pred_check
      _
    $region3: #{tpu_custom_call.1} parent=1 // pred_check_branch
      %13 = sbr.rel (0) target = $region5
    $region4: #{tpu_custom_call.1} parent=1 // pred_region
      _
    $region5: #{tpu_custom_call.1} parent=1 // pred_fallthru
      _
    // Predicated region
    $region6: #{tpu_custom_call.1} parent=1 // pred_check
      _
    $region7: #{tpu_custom_call.1} parent=1 // pred_check_branch
      %15 = sbr.rel (0) target = $region9
    $region8: #{tpu_custom_call.1} parent=1 // pred_region
      _
    $region9: #{tpu_custom_call.1} parent=1 // pred_fallthru
      _
    // Predicated region
    $region10: #{tpu_custom_call.1} parent=1 // pred_check
      _
    $region11: #{tpu_custom_call.1} parent=1 // pred_check_branch
      %17 = sbr.rel (0) target = $region13
    $region12: #{tpu_custom_call.1} parent=1 // pred_region
      _
    $region13: #{tpu_custom_call.1} parent=1 // pred_fallthru
      _
    // Predicated region
    $region14: #{tpu_custom_call.1} parent=1 // pred_check
      _
    $region15: #{tpu_custom_call.1} parent=1 // pred_check_branch
      %19 = sbr.rel (0) target = $region17
    $region16: #{tpu_custom_call.1} parent=1 // pred_region
      _
    $region17: #{tpu_custom_call.1} parent=1 // pred_fallthru
      _
    // Predicated region
    $region18: #{tpu_custom_call.1} parent=1 // pred_check
      _
    $region19: #{tpu_custom_call.1} parent=1 // pred_check_branch
      %21 = sbr.rel (0) target = $region21
    $region20: #{tpu_custom_call.1} parent=1 // pred_region
      _
    $region21: #{tpu_custom_call.1} parent=1 // pred_fallthru
      _
    // Predicated region
    $region22: #{tpu_custom_call.1} parent=1 // pred_check
      _
    $region23: #{tpu_custom_call.1} parent=1 // pred_check_branch
      %23 = sbr.rel (0) target = $region25
    $region24: #{tpu_custom_call.1} parent=1 // pred_region
      _
    $region25: #{tpu_custom_call.1} parent=1 // pred_fallthru
      _
    %v24 = vld [vmem:[%s1] sm:$0x3]
    %v25 = vld [vmem:[%s2] sm:$0x1]
    %v26 = vld [vmem:[%s3] sm:$0x1]
    %v27 = vld [vmem:[%s4] sm:$0xff]
    %v28 = vld [vmem:[%s4 + $0x8] sm:$0xff]
    %v29 = vld [vmem:[%s4 + $0x10] sm:$0xff]
    %v30 = vld [vmem:[%s5] sm:$0x1]
    %v32 = vlaneseq
    %v33 = vshrl.u32 %v32, 7
    %v34 = vsub.s32 0, %v33
    %v35 = vrot.slane %v25, %v34
    %v37 = vmul.f32 %v35, 0.0
    %v39 = vlaneseq
    %v40 = vshrl.u32 %v39, 7
    %v41 = vsub.s32 0, %v40
    %v42 = vrot.slane %v26, %v41
    %v44 = vmul.f32 %v42, 0.0
    %v45 = vadd.f32 %v37, %v44
    %vm46 = vcmask 130048
    %v47 = vsel %vm46, %v45, 0.0
    %48 = vadd.xlane.f32.xlu0 %v47
    %v49 = vpop.xlane.xlu0 %48
    %v50 = vadd.f32 %v24, %v49
    %vm51 = vcmask 58368
    %v52 = vsel %vm51, %v50, -inf
    %53 = vmax.xlane.f32.xlu0 %v52
    %v54 = vpop.xlane.xlu0 %53
    %v55 = vsub.f32 %v50, %v54
    %v56 = vmul.f32 %v55, 1.442695
    %v57 = vpow.pop %v56
    %v58 = vsel %vm51, %v57, 0.0
    %59 = vadd.xlane.f32.xlu0 %v58
    %v60 = vpop.xlane.xlu0 %59
    %v61 = vrcp.pop %v60
    %v62 = vmul.f32 %v57, %v61
    %v63 = vld [vmem:[%s0] sm:$0x3]
    %v64 = vmul.f32 %v62, %v63
    %vm65 = vcmask 64512
    %v66 = vsel %vm65, %v64, 0.0
    %v68 = vlaneseq
    %v69 = vshrl.u32 %v68, 7
    %v70 = vsub.s32 0, %v69
    %v71 = vrot.slane %v30, %v70
    %vm73 = vcmask 195584
    %v75 = vsel %vm73, %v66, 0
    %77 = vmatprep.subr.mxu0 0.0
    %78 = vmatpush1.msra.mxu0 0.0
    %79 = vmatprep.subr.mxu0 0.0
    %80 = vmatpush1.msra.mxu0 0.0
    %81 = vmatprep.subr.mxu0 0.0
    %82 = vmatpush1.msra.mxu0 0.0
    %83 = vmatprep.subr.mxu0 0.0
    %84 = vmatpush1.msra.mxu0 0.0
    %85 = vmatprep.subr.mxu0 0.0
    %86 = vmatpush1.msra.mxu0 0.0
    %87 = vmatprep.subr.mxu0 0.0
    %88 = vmatpush1.msra.mxu0 0.0
    %89 = vmatprep.subr.mxu0 0.0
    %90 = vmatpush1.msra.mxu0 0.0
    %91 = vmatprep.subr.mxu0 0.0
    %92 = vmatpush1.msra.mxu0 0.0
    %93 = vmatprep.subr.mxu0 0.0
    %94 = vmatpush1.msra.mxu0 0.0
    %95 = vmatprep.subr.mxu0 0.0
    %96 = vmatpush1.msra.mxu0 0.0
    %97 = vmatprep.subr.mxu0 0.0
    %98 = vmatpush1.msra.mxu0 0.0
    %99 = vmatprep.subr.mxu0 0.0
    %100 = vmatpush1.msra.mxu0 0.0
    %101 = vmatprep.subr.mxu0 0.0
    %102 = vmatpush1.msra.mxu0 0.0
    %103 = vmatprep.subr.mxu0 0.0
    %104 = vmatpush1.msra.mxu0 %v29
    %105 = vmatprep.subr.mxu0 0.0
    %106 = vmatpush1.msra.mxu0 %v28
    %107 = vmatprep.subr.mxu0 0.0
    %108 = vmatpush1.msra.mxu0 %v27
    %109 = vmatprep.subr.mxu0 0.0
    %110 = vmatpush2.msra.mxu0 0.0
    %111 = vmatprep.subr.mxu0 0.0
    %112 = vmatpush2.msra.mxu0 0.0
    %113 = vmatprep.subr.mxu0 0.0
    %114 = vmatpush2.msra.mxu0 0.0
    %115 = vmatprep.subr.mxu0 0.0
    %116 = vmatpush2.msra.mxu0 0.0
    %117 = vmatprep.subr.mxu0 0.0
    %118 = vmatpush2.msra.mxu0 0.0
    %119 = vmatprep.subr.mxu0 0.0
    %120 = vmatpush2.msra.mxu0 0.0
    %121 = vmatprep.subr.mxu0 0.0
    %122 = vmatpush2.msra.mxu0 0.0
    %123 = vmatprep.subr.mxu0 0.0
    %124 = vmatpush2.msra.mxu0 0.0
    %125 = vmatprep.subr.mxu0 0.0
    %126 = vmatpush2.msra.mxu0 0.0
    %127 = vmatprep.subr.mxu0 0.0
    %128 = vmatpush2.msra.mxu0 0.0
    %129 = vmatprep.subr.mxu0 0.0
    %130 = vmatpush2.msra.mxu0 0.0
    %131 = vmatprep.subr.mxu0 0.0
    %132 = vmatpush2.msra.mxu0 0.0
    %133 = vmatprep.subr.mxu0 0.0
    %134 = vmatpush2.msra.mxu0 0.0
    %135 = vmatprep.subr.mxu0 0.0
    %136 = vmatpush2.msra.mxu0 0.0
    %137 = vmatprep.subr.mxu0 0.0
    %138 = vmatpush2.msra.mxu0 0.0
    %139 = vmatprep.subr.mxu0 0.0
    %140 = vmatpush2.msra.mxu0 0.0
    %141 = vmatprep.mubr.f32.mxu0 0.0
    %142 = vmatmul.mubr.f32.gmra.mxu0 %v75
    %v143 = vpop.f32.mrf.mxu0
    %v144 = vadd.f32 %v71, %v143
    %v145 = vpop.f32.mrf.mxu0
    %146 = vdwg.mxu0
    %v147 = vxor.u32 %v144, 2147483648
    %v148 = vmul.f32 %v147, 1.442695
    %v149 = vpow.pop %v148
    %v150 = vadd.f32 %v149, 1.0
    %v151 = vrcp.pop %v150
    %v152 = vmul.f32 1.0, %v151
    %v153 = vtanh.pop %v144
    %v154 = vmul.f32 %v152, 0.0
    %156 = vrot.lane.b32.xlu0 %v153, 96
    %v157 = vpop.permute.xlu0 %156
    %v159 = vmul.f32 %v152, %v157
    %161 = vrot.lane.b32.xlu0 %v159, 16
    %v162 = vpop.permute.xlu0 %161
    %v164 = vadd.f32 %v154, %v162
    %v165 = vtanh.pop %v164
    %167 = vrot.lane.b32.xlu0 %v165, 32
    %v168 = vpop.permute.xlu0 %167
    %v170 = vmul.f32 %v152, %v168
    %172 = vrot.lane.b32.xlu0 %v170, 88
    %v173 = vpop.permute.xlu0 %172
    %v175 = vsel %vm65, %v64, %v173
    %vm176 = vcmask 189440
    %177 = vst.msk [vmem:[#allocation2] sm:$0x3] %vm176, %v175
    %178 = vrot.lane.b32.xlu0 %v35, 48
    %v179 = vpop.permute.xlu0 %178
    %v181 = vmul.f32 %v170, %v179
    %182 = vrot.lane.b32.xlu0 %v42, 16
    %v183 = vpop.permute.xlu0 %182
    %v185 = vmul.f32 %v164, %v183
    %187 = vrot.lane.b32.xlu0 %v185, 32
    %v188 = vpop.permute.xlu0 %187
    %v190 = vadd.f32 %v181, %v188
    %192 = vrot.lane.b32.xlu0 %v190, 80
    %v193 = vpop.permute.xlu0 %192
    %vm195 = vcmask 123904
    %v196 = vsel %vm195, %v193, 0.0
    %197 = vadd.xlane.f32.xlu0 %v196
    %v198 = vpop.xlane.xlu0 %197
    %v199 = vadd.f32 %v24, %v198
    %v200 = vsel %vm51, %v199, -inf
    %201 = vmax.xlane.f32.xlu0 %v200
    %v202 = vpop.xlane.xlu0 %201
    %v203 = vsub.f32 %v199, %v202
    %v204 = vmul.f32 %v203, 1.442695
    %v205 = vpow.pop %v204
    %v206 = vsel %vm51, %v205, 0.0
    %207 = vadd.xlane.f32.xlu0 %v206
    %v208 = vpop.xlane.xlu0 %207
    %v209 = vrcp.pop %v208
    %v210 = vmul.f32 %v205, %v209
    %s211 = scalar_lea.vmem %s0, 2
    %v212 = vld [vmem:[%s211] sm:$0x3]
    %v213 = vmul.f32 %v210, %v212
    %v214 = vsel %vm65, %v213, %v173
    %v216 = vsel %vm73, %v214, 0
    %218 = vmatprep.subr.mxu0 0.0
    %219 = vmatpush1.msra.mxu0 0.0
    %220 = vmatprep.subr.mxu0 0.0
    %221 = vmatpush1.msra.mxu0 0.0
    %222 = vmatprep.subr.mxu0 0.0
    %223 = vmatpush1.msra.mxu0 0.0
    %224 = vmatprep.subr.mxu0 0.0
    %225 = vmatpush1.msra.mxu0 0.0
    %226 = vmatprep.subr.mxu0 0.0
    %227 = vmatpush1.msra.mxu0 0.0
    %228 = vmatprep.subr.mxu0 0.0
    %229 = vmatpush1.msra.mxu0 0.0
    %230 = vmatprep.subr.mxu0 0.0
    %231 = vmatpush1.msra.mxu0 0.0
    %232 = vmatprep.subr.mxu0 0.0
    %233 = vmatpush1.msra.mxu0 0.0
    %234 = vmatprep.subr.mxu0 0.0
    %235 = vmatpush1.msra.mxu0 0.0
    %236 = vmatprep.subr.mxu0 0.0
    %237 = vmatpush1.msra.mxu0 0.0
    %238 = vmatprep.subr.mxu0 0.0
    %239 = vmatpush1.msra.mxu0 0.0
    %240 = vmatprep.subr.mxu0 0.0
    %241 = vmatpush1.msra.mxu0 0.0
    %242 = vmatprep.subr.mxu0 0.0
    %243 = vmatpush1.msra.mxu0 0.0
    %244 = vmatprep.subr.mxu0 0.0
    %245 = vmatpush1.msra.mxu0 %v29
    %246 = vmatprep.subr.mxu0 0.0
    %247 = vmatpush1.msra.mxu0 %v28
    %248 = vmatprep.subr.mxu0 0.0
    %249 = vmatpush1.msra.mxu0 %v27
    %250 = vmatprep.subr.mxu0 0.0
    %251 = vmatpush2.msra.mxu0 0.0
    %252 = vmatprep.subr.mxu0 0.0
    %253 = vmatpush2.msra.mxu0 0.0
    %254 = vmatprep.subr.mxu0 0.0
    %255 = vmatpush2.msra.mxu0 0.0
    %256 = vmatprep.subr.mxu0 0.0
    %257 = vmatpush2.msra.mxu0 0.0
    %258 = vmatprep.subr.mxu0 0.0
    %259 = vmatpush2.msra.mxu0 0.0
    %260 = vmatprep.subr.mxu0 0.0
    %261 = vmatpush2.msra.mxu0 0.0
    %262 = vmatprep.subr.mxu0 0.0
    %263 = vmatpush2.msra.mxu0 0.0
    %264 = vmatprep.subr.mxu0 0.0
    %265 = vmatpush2.msra.mxu0 0.0
    %266 = vmatprep.subr.mxu0 0.0
    %267 = vmatpush2.msra.mxu0 0.0
    %268 = vmatprep.subr.mxu0 0.0
    %269 = vmatpush2.msra.mxu0 0.0
    %270 = vmatprep.subr.mxu0 0.0
    %271 = vmatpush2.msra.mxu0 0.0
    %272 = vmatprep.subr.mxu0 0.0
    %273 = vmatpush2.msra.mxu0 0.0
    %274 = vmatprep.subr.mxu0 0.0
    %275 = vmatpush2.msra.mxu0 0.0
    %276 = vmatprep.subr.mxu0 0.0
    %277 = vmatpush2.msra.mxu0 0.0
    %278 = vmatprep.subr.mxu0 0.0
    %279 = vmatpush2.msra.mxu0 0.0
    %280 = vmatprep.subr.mxu0 0.0
    %281 = vmatpush2.msra.mxu0 0.0
    %282 = vmatprep.mubr.f32.mxu0 0.0
    %283 = vmatmul.mubr.f32.gmra.mxu0 %v216
    %v284 = vpop.f32.mrf.mxu0
    %v285 = vadd.f32 %v71, %v284
    %v286 = vpop.f32.mrf.mxu0
    %287 = vdwg.mxu0
    %v288 = vxor.u32 %v285, 2147483648
    %v289 = vmul.f32 %v288, 1.442695
    %v290 = vpow.pop %v289
    %v291 = vadd.f32 %v290, 1.0
    %v292 = vrcp.pop %v291
    %v293 = vmul.f32 1.0, %v292
    %v294 = vtanh.pop %v285
    %v295 = vmul.f32 %v293, %v164
    %297 = vrot.lane.b32.xlu0 %v294, 96
    %v298 = vpop.permute.xlu0 %297
    %v300 = vmul.f32 %v293, %v298
    %302 = vrot.lane.b32.xlu0 %v300, 16
    %v303 = vpop.permute.xlu0 %302
    %v305 = vadd.f32 %v295, %v303
    %v306 = vtanh.pop %v305
    %308 = vrot.lane.b32.xlu0 %v306, 32
    %v309 = vpop.permute.xlu0 %308
    %v311 = vmul.f32 %v293, %v309
    %313 = vrot.lane.b32.xlu0 %v311, 88
    %v314 = vpop.permute.xlu0 %313
    %v316 = vsel %vm65, %v213, %v314
    %s317 = scalar_lea.vmem [#allocation2], 2
    %318 = vst.msk [vmem:[%s317] sm:$0x3] %vm176, %v316
    %v319 = vmul.f32 %v311, %v179
    %v320 = vmul.f32 %v305, %v183
    %322 = vrot.lane.b32.xlu0 %v320, 32
    %v323 = vpop.permute.xlu0 %322
    %v325 = vadd.f32 %v319, %v323
    %327 = vrot.lane.b32.xlu0 %v325, 80
    %v328 = vpop.permute.xlu0 %327
    %v330 = vsel %vm195, %v328, 0.0
    %331 = vadd.xlane.f32.xlu0 %v330
    %v332 = vpop.xlane.xlu0 %331
    %v333 = vadd.f32 %v24, %v332
    %v334 = vsel %vm51, %v333, -inf
    %335 = vmax.xlane.f32.xlu0 %v334
    %v336 = vpop.xlane.xlu0 %335
    %v337 = vsub.f32 %v333, %v336
    %v338 = vmul.f32 %v337, 1.442695
    %v339 = vpow.pop %v338
    %v340 = vsel %vm51, %v339, 0.0
    %341 = vadd.xlane.f32.xlu0 %v340
    %v342 = vpop.xlane.xlu0 %341
    %v343 = vrcp.pop %v342
    %v344 = vmul.f32 %v339, %v343
    %s345 = scalar_lea.vmem %s0, 4
    %v346 = vld [vmem:[%s345] sm:$0x3]
    %v347 = vmul.f32 %v344, %v346
    %v348 = vsel %vm65, %v347, %v314
    %v350 = vsel %vm73, %v348, 0
    %352 = vmatprep.subr.mxu0 0.0
    %353 = vmatpush1.msra.mxu0 0.0
    %354 = vmatprep.subr.mxu0 0.0
    %355 = vmatpush1.msra.mxu0 0.0
    %356 = vmatprep.subr.mxu0 0.0
    %357 = vmatpush1.msra.mxu0 0.0
    %358 = vmatprep.subr.mxu0 0.0
    %359 = vmatpush1.msra.mxu0 0.0
    %360 = vmatprep.subr.mxu0 0.0
    %361 = vmatpush1.msra.mxu0 0.0
    %362 = vmatprep.subr.mxu0 0.0
    %363 = vmatpush1.msra.mxu0 0.0
    %364 = vmatprep.subr.mxu0 0.0
    %365 = vmatpush1.msra.mxu0 0.0
    %366 = vmatprep.subr.mxu0 0.0
    %367 = vmatpush1.msra.mxu0 0.0
    %368 = vmatprep.subr.mxu0 0.0
    %369 = vmatpush1.msra.mxu0 0.0
    %370 = vmatprep.subr.mxu0 0.0
    %371 = vmatpush1.msra.mxu0 0.0
    %372 = vmatprep.subr.mxu0 0.0
    %373 = vmatpush1.msra.mxu0 0.0
    %374 = vmatprep.subr.mxu0 0.0
    %375 = vmatpush1.msra.mxu0 0.0
    %376 = vmatprep.subr.mxu0 0.0
    %377 = vmatpush1.msra.mxu0 0.0
    %378 = vmatprep.subr.mxu0 0.0
    %379 = vmatpush1.msra.mxu0 %v29
    %380 = vmatprep.subr.mxu0 0.0
    %381 = vmatpush1.msra.mxu0 %v28
    %382 = vmatprep.subr.mxu0 0.0
    %383 = vmatpush1.msra.mxu0 %v27
    %384 = vmatprep.subr.mxu0 0.0
    %385 = vmatpush2.msra.mxu0 0.0
    %386 = vmatprep.subr.mxu0 0.0
    %387 = vmatpush2.msra.mxu0 0.0
    %388 = vmatprep.subr.mxu0 0.0
    %389 = vmatpush2.msra.mxu0 0.0
    %390 = vmatprep.subr.mxu0 0.0
    %391 = vmatpush2.msra.mxu0 0.0
    %392 = vmatprep.subr.mxu0 0.0
    %393 = vmatpush2.msra.mxu0 0.0
    %394 = vmatprep.subr.mxu0 0.0
    %395 = vmatpush2.msra.mxu0 0.0
    %396 = vmatprep.subr.mxu0 0.0
    %397 = vmatpush2.msra.mxu0 0.0
    %398 = vmatprep.subr.mxu0 0.0
    %399 = vmatpush2.msra.mxu0 0.0
    %400 = vmatprep.subr.mxu0 0.0
    %401 = vmatpush2.msra.mxu0 0.0
    %402 = vmatprep.subr.mxu0 0.0
    %403 = vmatpush2.msra.mxu0 0.0
    %404 = vmatprep.subr.mxu0 0.0
    %405 = vmatpush2.msra.mxu0 0.0
    %406 = vmatprep.subr.mxu0 0.0
    %407 = vmatpush2.msra.mxu0 0.0
    %408 = vmatprep.subr.mxu0 0.0
    %409 = vmatpush2.msra.mxu0 0.0
    %410 = vmatprep.subr.mxu0 0.0
    %411 = vmatpush2.msra.mxu0 0.0
    %412 = vmatprep.subr.mxu0 0.0
    %413 = vmatpush2.msra.mxu0 0.0
    %414 = vmatprep.subr.mxu0 0.0
    %415 = vmatpush2.msra.mxu0 0.0
    %416 = vmatprep.mubr.f32.mxu0 0.0
    %417 = vmatmul.mubr.f32.gmra.mxu0 %v350
    %v418 = vpop.f32.mrf.mxu0
    %v419 = vadd.f32 %v71, %v418
    %v420 = vpop.f32.mrf.mxu0
    %421 = vdwg.mxu0
    %v422 = vxor.u32 %v419, 2147483648
    %v423 = vmul.f32 %v422, 1.442695
    %v424 = vpow.pop %v423
    %v425 = vadd.f32 %v424, 1.0
    %v426 = vrcp.pop %v425
    %v427 = vmul.f32 1.0, %v426
    %v428 = vtanh.pop %v419
    %v429 = vmul.f32 %v427, %v305
    %431 = vrot.lane.b32.xlu0 %v428, 96
    %v432 = vpop.permute.xlu0 %431
    %v434 = vmul.f32 %v427, %v432
    %436 = vrot.lane.b32.xlu0 %v434, 16
    %v437 = vpop.permute.xlu0 %436
    %v439 = vadd.f32 %v429, %v437
    %v440 = vtanh.pop %v439
    %442 = vrot.lane.b32.xlu0 %v440, 32
    %v443 = vpop.permute.xlu0 %442
    %v445 = vmul.f32 %v427, %v443
    %447 = vrot.lane.b32.xlu0 %v445, 88
    %v448 = vpop.permute.xlu0 %447
    %v450 = vsel %vm65, %v347, %v448
    %s451 = scalar_lea.vmem [#allocation2], 4
    %452 = vst.msk [vmem:[%s451] sm:$0x3] %vm176, %v450
    %v453 = vmul.f32 %v445, %v179
    %v454 = vmul.f32 %v439, %v183
    %456 = vrot.lane.b32.xlu0 %v454, 32
    %v457 = vpop.permute.xlu0 %456
    %v459 = vadd.f32 %v453, %v457
    %461 = vrot.lane.b32.xlu0 %v459, 80
    %v462 = vpop.permute.xlu0 %461
    %v464 = vsel %vm195, %v462, 0.0
    %465 = vadd.xlane.f32.xlu0 %v464
    %v466 = vpop.xlane.xlu0 %465
    %v467 = vadd.f32 %v24, %v466
    %v468 = vsel %vm51, %v467, -inf
    %469 = vmax.xlane.f32.xlu0 %v468
    %v470 = vpop.xlane.xlu0 %469
    %v471 = vsub.f32 %v467, %v470
    %v472 = vmul.f32 %v471, 1.442695
    %v473 = vpow.pop %v472
    %v474 = vsel %vm51, %v473, 0.0
    %475 = vadd.xlane.f32.xlu0 %v474
    %v476 = vpop.xlane.xlu0 %475
    %v477 = vrcp.pop %v476
    %v478 = vmul.f32 %v473, %v477
    %s479 = scalar_lea.vmem %s0, 6
    %v480 = vld [vmem:[%s479] sm:$0x3]
    %v481 = vmul.f32 %v478, %v480
    %v482 = vsel %vm65, %v481, %v448
    %v484 = vsel %vm73, %v482, 0
    %486 = vmatprep.subr.mxu0 0.0
    %487 = vmatpush1.msra.mxu0 0.0
    %488 = vmatprep.subr.mxu0 0.0
    %489 = vmatpush1.msra.mxu0 0.0
    %490 = vmatprep.subr.mxu0 0.0
    %491 = vmatpush1.msra.mxu0 0.0
    %492 = vmatprep.subr.mxu0 0.0
    %493 = vmatpush1.msra.mxu0 0.0
    %494 = vmatprep.subr.mxu0 0.0
    %495 = vmatpush1.msra.mxu0 0.0
    %496 = vmatprep.subr.mxu0 0.0
    %497 = vmatpush1.msra.mxu0 0.0
    %498 = vmatprep.subr.mxu0 0.0
    %499 = vmatpush1.msra.mxu0 0.0
    %500 = vmatprep.subr.mxu0 0.0
    %501 = vmatpush1.msra.mxu0 0.0
    %502 = vmatprep.subr.mxu0 0.0
    %503 = vmatpush1.msra.mxu0 0.0
    %504 = vmatprep.subr.mxu0 0.0
    %505 = vmatpush1.msra.mxu0 0.0
    %506 = vmatprep.subr.mxu0 0.0
    %507 = vmatpush1.msra.mxu0 0.0
    %508 = vmatprep.subr.mxu0 0.0
    %509 = vmatpush1.msra.mxu0 0.0
    %510 = vmatprep.subr.mxu0 0.0
    %511 = vmatpush1.msra.mxu0 0.0
    %512 = vmatprep.subr.mxu0 0.0
    %513 = vmatpush1.msra.mxu0 %v29
    %514 = vmatprep.subr.mxu0 0.0
    %515 = vmatpush1.msra.mxu0 %v28
    %516 = vmatprep.subr.mxu0 0.0
    %517 = vmatpush1.msra.mxu0 %v27
    %518 = vmatprep.subr.mxu0 0.0
    %519 = vmatpush2.msra.mxu0 0.0
    %520 = vmatprep.subr.mxu0 0.0
    %521 = vmatpush2.msra.mxu0 0.0
    %522 = vmatprep.subr.mxu0 0.0
    %523 = vmatpush2.msra.mxu0 0.0
    %524 = vmatprep.subr.mxu0 0.0
    %525 = vmatpush2.msra.mxu0 0.0
    %526 = vmatprep.subr.mxu0 0.0
    %527 = vmatpush2.msra.mxu0 0.0
    %528 = vmatprep.subr.mxu0 0.0
    %529 = vmatpush2.msra.mxu0 0.0
    %530 = vmatprep.subr.mxu0 0.0
    %531 = vmatpush2.msra.mxu0 0.0
    %532 = vmatprep.subr.mxu0 0.0
    %533 = vmatpush2.msra.mxu0 0.0
    %534 = vmatprep.subr.mxu0 0.0
    %535 = vmatpush2.msra.mxu0 0.0
    %536 = vmatprep.subr.mxu0 0.0
    %537 = vmatpush2.msra.mxu0 0.0
    %538 = vmatprep.subr.mxu0 0.0
    %539 = vmatpush2.msra.mxu0 0.0
    %540 = vmatprep.subr.mxu0 0.0
    %541 = vmatpush2.msra.mxu0 0.0
    %542 = vmatprep.subr.mxu0 0.0
    %543 = vmatpush2.msra.mxu0 0.0
    %544 = vmatprep.subr.mxu0 0.0
    %545 = vmatpush2.msra.mxu0 0.0
    %546 = vmatprep.subr.mxu0 0.0
    %547 = vmatpush2.msra.mxu0 0.0
    %548 = vmatprep.subr.mxu0 0.0
    %549 = vmatpush2.msra.mxu0 0.0
    %550 = vmatprep.mubr.f32.mxu0 0.0
    %551 = vmatmul.mubr.f32.gmra.mxu0 %v484
    %v552 = vpop.f32.mrf.mxu0
    %v553 = vadd.f32 %v71, %v552
    %v554 = vpop.f32.mrf.mxu0
    %555 = vdwg.mxu0
    %v556 = vxor.u32 %v553, 2147483648
    %v557 = vmul.f32 %v556, 1.442695
    %v558 = vpow.pop %v557
    %v559 = vadd.f32 %v558, 1.0
    %v560 = vrcp.pop %v559
    %v561 = vmul.f32 1.0, %v560
    %v562 = vtanh.pop %v553
    %v563 = vmul.f32 %v561, %v439
    %565 = vrot.lane.b32.xlu0 %v562, 96
    %v566 = vpop.permute.xlu0 %565
    %v568 = vmul.f32 %v561, %v566
    %570 = vrot.lane.b32.xlu0 %v568, 16
    %v571 = vpop.permute.xlu0 %570
    %v573 = vadd.f32 %v563, %v571
    %v574 = vtanh.pop %v573
    %576 = vrot.lane.b32.xlu0 %v574, 32
    %v577 = vpop.permute.xlu0 %576
    %v579 = vmul.f32 %v561, %v577
    %581 = vrot.lane.b32.xlu0 %v579, 88
    %v582 = vpop.permute.xlu0 %581
    %v584 = vsel %vm65, %v481, %v582
    %s585 = scalar_lea.vmem [#allocation2], 6
    %586 = vst.msk [vmem:[%s585] sm:$0x3] %vm176, %v584
    %v587 = vmul.f32 %v579, %v179
    %v588 = vmul.f32 %v573, %v183
    %590 = vrot.lane.b32.xlu0 %v588, 32
    %v591 = vpop.permute.xlu0 %590
    %v593 = vadd.f32 %v587, %v591
    %595 = vrot.lane.b32.xlu0 %v593, 80
    %v596 = vpop.permute.xlu0 %595
    %v598 = vsel %vm195, %v596, 0.0
    %599 = vadd.xlane.f32.xlu0 %v598
    %v600 = vpop.xlane.xlu0 %599
    %v601 = vadd.f32 %v24, %v600
    %v602 = vsel %vm51, %v601, -inf
    %603 = vmax.xlane.f32.xlu0 %v602
    %v604 = vpop.xlane.xlu0 %603
    %v605 = vsub.f32 %v601, %v604
    %v606 = vmul.f32 %v605, 1.442695
    %v607 = vpow.pop %v606
    %v608 = vsel %vm51, %v607, 0.0
    %609 = vadd.xlane.f32.xlu0 %v608
    %v610 = vpop.xlane.xlu0 %609
    %v611 = vrcp.pop %v610
    %v612 = vmul.f32 %v607, %v611
    %s613 = scalar_lea.vmem %s0, 8
    %v614 = vld [vmem:[%s613] sm:$0x3]
    %v615 = vmul.f32 %v612, %v614
    %v616 = vsel %vm65, %v615, %v582
    %v618 = vsel %vm73, %v616, 0
    %620 = vmatprep.subr.mxu0 0.0
    %621 = vmatpush1.msra.mxu0 0.0
    %622 = vmatprep.subr.mxu0 0.0
    %623 = vmatpush1.msra.mxu0 0.0
    %624 = vmatprep.subr.mxu0 0.0
    %625 = vmatpush1.msra.mxu0 0.0
    %626 = vmatprep.subr.mxu0 0.0
    %627 = vmatpush1.msra.mxu0 0.0
    %628 = vmatprep.subr.mxu0 0.0
    %629 = vmatpush1.msra.mxu0 0.0
    %630 = vmatprep.subr.mxu0 0.0
    %631 = vmatpush1.msra.mxu0 0.0
    %632 = vmatprep.subr.mxu0 0.0
    %633 = vmatpush1.msra.mxu0 0.0
    %634 = vmatprep.subr.mxu0 0.0
    %635 = vmatpush1.msra.mxu0 0.0
    %636 = vmatprep.subr.mxu0 0.0
    %637 = vmatpush1.msra.mxu0 0.0
    %638 = vmatprep.subr.mxu0 0.0
    %639 = vmatpush1.msra.mxu0 0.0
    %640 = vmatprep.subr.mxu0 0.0
    %641 = vmatpush1.msra.mxu0 0.0
    %642 = vmatprep.subr.mxu0 0.0
    %643 = vmatpush1.msra.mxu0 0.0
    %644 = vmatprep.subr.mxu0 0.0
    %645 = vmatpush1.msra.mxu0 0.0
    %646 = vmatprep.subr.mxu0 0.0
    %647 = vmatpush1.msra.mxu0 %v29
    %648 = vmatprep.subr.mxu0 0.0
    %649 = vmatpush1.msra.mxu0 %v28
    %650 = vmatprep.subr.mxu0 0.0
    %651 = vmatpush1.msra.mxu0 %v27
    %652 = vmatprep.subr.mxu0 0.0
    %653 = vmatpush2.msra.mxu0 0.0
    %654 = vmatprep.subr.mxu0 0.0
    %655 = vmatpush2.msra.mxu0 0.0
    %656 = vmatprep.subr.mxu0 0.0
    %657 = vmatpush2.msra.mxu0 0.0
    %658 = vmatprep.subr.mxu0 0.0
    %659 = vmatpush2.msra.mxu0 0.0
    %660 = vmatprep.subr.mxu0 0.0
    %661 = vmatpush2.msra.mxu0 0.0
    %662 = vmatprep.subr.mxu0 0.0
    %663 = vmatpush2.msra.mxu0 0.0
    %664 = vmatprep.subr.mxu0 0.0
    %665 = vmatpush2.msra.mxu0 0.0
    %666 = vmatprep.subr.mxu0 0.0
    %667 = vmatpush2.msra.mxu0 0.0
    %668 = vmatprep.subr.mxu0 0.0
    %669 = vmatpush2.msra.mxu0 0.0
    %670 = vmatprep.subr.mxu0 0.0
    %671 = vmatpush2.msra.mxu0 0.0
    %672 = vmatprep.subr.mxu0 0.0
    %673 = vmatpush2.msra.mxu0 0.0
    %674 = vmatprep.subr.mxu0 0.0
    %675 = vmatpush2.msra.mxu0 0.0
    %676 = vmatprep.subr.mxu0 0.0
    %677 = vmatpush2.msra.mxu0 0.0
    %678 = vmatprep.subr.mxu0 0.0
    %679 = vmatpush2.msra.mxu0 0.0
    %680 = vmatprep.subr.mxu0 0.0
    %681 = vmatpush2.msra.mxu0 0.0
    %682 = vmatprep.subr.mxu0 0.0
    %683 = vmatpush2.msra.mxu0 0.0
    %684 = vmatprep.mubr.f32.mxu0 0.0
    %685 = vmatmul.mubr.f32.gmra.mxu0 %v618
    %v686 = vpop.f32.mrf.mxu0
    %v687 = vadd.f32 %v71, %v686
    %v688 = vpop.f32.mrf.mxu0
    %689 = vdwg.mxu0
    %v690 = vxor.u32 %v687, 2147483648
    %v691 = vmul.f32 %v690, 1.442695
    %v692 = vpow.pop %v691
    %v693 = vadd.f32 %v692, 1.0
    %v694 = vrcp.pop %v693
    %v695 = vmul.f32 1.0, %v694
    %v696 = vtanh.pop %v687
    %v697 = vmul.f32 %v695, %v573
    %699 = vrot.lane.b32.xlu0 %v696, 96
    %v700 = vpop.permute.xlu0 %699
    %v702 = vmul.f32 %v695, %v700
    %704 = vrot.lane.b32.xlu0 %v702, 16
    %v705 = vpop.permute.xlu0 %704
    %v707 = vadd.f32 %v697, %v705
    %v708 = vtanh.pop %v707
    %710 = vrot.lane.b32.xlu0 %v708, 32
    %v711 = vpop.permute.xlu0 %710
    %v713 = vmul.f32 %v695, %v711
    %715 = vrot.lane.b32.xlu0 %v713, 88
    %v716 = vpop.permute.xlu0 %715
    %v718 = vsel %vm65, %v615, %v716
    %s719 = scalar_lea.vmem [#allocation2], 8
    %720 = vst.msk [vmem:[%s719] sm:$0x3] %vm176, %v718
    %v721 = vmul.f32 %v713, %v179
    %v722 = vmul.f32 %v707, %v183
    %724 = vrot.lane.b32.xlu0 %v722, 32
    %v725 = vpop.permute.xlu0 %724
    %v727 = vadd.f32 %v721, %v725
    %729 = vrot.lane.b32.xlu0 %v727, 80
    %v730 = vpop.permute.xlu0 %729
    %v732 = vsel %vm195, %v730, 0.0
    %733 = vadd.xlane.f32.xlu0 %v732
    %v734 = vpop.xlane.xlu0 %733
    %v735 = vadd.f32 %v24, %v734
    %v736 = vsel %vm51, %v735, -inf
    %737 = vmax.xlane.f32.xlu0 %v736
    %v738 = vpop.xlane.xlu0 %737
    %v739 = vsub.f32 %v735, %v738
    %v740 = vmul.f32 %v739, 1.442695
    %v741 = vpow.pop %v740
    %v742 = vsel %vm51, %v741, 0.0
    %743 = vadd.xlane.f32.xlu0 %v742
    %v744 = vpop.xlane.xlu0 %743
    %v745 = vrcp.pop %v744
    %v746 = vmul.f32 %v741, %v745
    %s747 = scalar_lea.vmem %s0, 10
    %v748 = vld [vmem:[%s747] sm:$0x3]
    %v749 = vmul.f32 %v746, %v748
    %v750 = vsel %vm65, %v749, %v716
    %v752 = vsel %vm73, %v750, 0
    %754 = vmatprep.subr.mxu0 0.0
    %755 = vmatpush1.msra.mxu0 0.0
    %756 = vmatprep.subr.mxu0 0.0
    %757 = vmatpush1.msra.mxu0 0.0
    %758 = vmatprep.subr.mxu0 0.0
    %759 = vmatpush1.msra.mxu0 0.0
    %760 = vmatprep.subr.mxu0 0.0
    %761 = vmatpush1.msra.mxu0 0.0
    %762 = vmatprep.subr.mxu0 0.0
    %763 = vmatpush1.msra.mxu0 0.0
    %764 = vmatprep.subr.mxu0 0.0
    %765 = vmatpush1.msra.mxu0 0.0
    %766 = vmatprep.subr.mxu0 0.0
    %767 = vmatpush1.msra.mxu0 0.0
    %768 = vmatprep.subr.mxu0 0.0
    %769 = vmatpush1.msra.mxu0 0.0
    %770 = vmatprep.subr.mxu0 0.0
    %771 = vmatpush1.msra.mxu0 0.0
    %772 = vmatprep.subr.mxu0 0.0
    %773 = vmatpush1.msra.mxu0 0.0
    %774 = vmatprep.subr.mxu0 0.0
    %775 = vmatpush1.msra.mxu0 0.0
    %776 = vmatprep.subr.mxu0 0.0
    %777 = vmatpush1.msra.mxu0 0.0
    %778 = vmatprep.subr.mxu0 0.0
    %779 = vmatpush1.msra.mxu0 0.0
    %780 = vmatprep.subr.mxu0 0.0
    %781 = vmatpush1.msra.mxu0 %v29
    %782 = vmatprep.subr.mxu0 0.0
    %783 = vmatpush1.msra.mxu0 %v28
    %784 = vmatprep.subr.mxu0 0.0
    %785 = vmatpush1.msra.mxu0 %v27
    %786 = vmatprep.subr.mxu0 0.0
    %787 = vmatpush2.msra.mxu0 0.0
    %788 = vmatprep.subr.mxu0 0.0
    %789 = vmatpush2.msra.mxu0 0.0
    %790 = vmatprep.subr.mxu0 0.0
    %791 = vmatpush2.msra.mxu0 0.0
    %792 = vmatprep.subr.mxu0 0.0
    %793 = vmatpush2.msra.mxu0 0.0
    %794 = vmatprep.subr.mxu0 0.0
    %795 = vmatpush2.msra.mxu0 0.0
    %796 = vmatprep.subr.mxu0 0.0
    %797 = vmatpush2.msra.mxu0 0.0
    %798 = vmatprep.subr.mxu0 0.0
    %799 = vmatpush2.msra.mxu0 0.0
    %800 = vmatprep.subr.mxu0 0.0
    %801 = vmatpush2.msra.mxu0 0.0
    %802 = vmatprep.subr.mxu0 0.0
    %803 = vmatpush2.msra.mxu0 0.0
    %804 = vmatprep.subr.mxu0 0.0
    %805 = vmatpush2.msra.mxu0 0.0
    %806 = vmatprep.subr.mxu0 0.0
    %807 = vmatpush2.msra.mxu0 0.0
    %808 = vmatprep.subr.mxu0 0.0
    %809 = vmatpush2.msra.mxu0 0.0
    %810 = vmatprep.subr.mxu0 0.0
    %811 = vmatpush2.msra.mxu0 0.0
    %812 = vmatprep.subr.mxu0 0.0
    %813 = vmatpush2.msra.mxu0 0.0
    %814 = vmatprep.subr.mxu0 0.0
    %815 = vmatpush2.msra.mxu0 0.0
    %816 = vmatprep.subr.mxu0 0.0
    %817 = vmatpush2.msra.mxu0 0.0
    %818 = vmatprep.mubr.f32.mxu0 0.0
    %819 = vmatmul.mubr.f32.gmra.mxu0 %v752
    %v820 = vpop.f32.mrf.mxu0
    %v821 = vadd.f32 %v71, %v820
    %v822 = vpop.f32.mrf.mxu0
    %823 = vdwg.mxu0
    %v824 = vxor.u32 %v821, 2147483648
    %v825 = vmul.f32 %v824, 1.442695
    %v826 = vpow.pop %v825
    %v827 = vadd.f32 %v826, 1.0
    %v828 = vrcp.pop %v827
    %v829 = vmul.f32 1.0, %v828
    %v830 = vtanh.pop %v821
    %v831 = vmul.f32 %v829, %v707
    %833 = vrot.lane.b32.xlu0 %v830, 96
    %v834 = vpop.permute.xlu0 %833
    %v836 = vmul.f32 %v829, %v834
    %838 = vrot.lane.b32.xlu0 %v836, 16
    %v839 = vpop.permute.xlu0 %838
    %v841 = vadd.f32 %v831, %v839
    %v842 = vtanh.pop %v841
    %844 = vrot.lane.b32.xlu0 %v842, 32
    %v845 = vpop.permute.xlu0 %844
    %v847 = vmul.f32 %v829, %v845
    %849 = vrot.lane.b32.xlu0 %v847, 88
    %v850 = vpop.permute.xlu0 %849
    %v852 = vsel %vm65, %v749, %v850
    %s853 = scalar_lea.vmem [#allocation2], 10
    %854 = vst.msk [vmem:[%s853] sm:$0x3] %vm176, %v852
    %v855 = vmul.f32 %v847, %v179
    %v856 = vmul.f32 %v841, %v183
    %858 = vrot.lane.b32.xlu0 %v856, 32
    %v859 = vpop.permute.xlu0 %858
    %v861 = vadd.f32 %v855, %v859
    %863 = vrot.lane.b32.xlu0 %v861, 80
    %v864 = vpop.permute.xlu0 %863
    %v866 = vsel %vm195, %v864, 0.0
    %867 = vadd.xlane.f32.xlu0 %v866
    %v868 = vpop.xlane.xlu0 %867
    %v869 = vadd.f32 %v24, %v868
    %v870 = vsel %vm51, %v869, -inf
    %871 = vmax.xlane.f32.xlu0 %v870
    %v872 = vpop.xlane.xlu0 %871
    %v873 = vsub.f32 %v869, %v872
    %v874 = vmul.f32 %v873, 1.442695
    %v875 = vpow.pop %v874
    %v876 = vsel %vm51, %v875, 0.0
    %877 = vadd.xlane.f32.xlu0 %v876
    %v878 = vpop.xlane.xlu0 %877
    %v879 = vrcp.pop %v878
    %v880 = vmul.f32 %v875, %v879
    %s881 = scalar_lea.vmem %s0, 12
    %v882 = vld [vmem:[%s881] sm:$0x3]
    %v883 = vmul.f32 %v880, %v882
    %v884 = vsel %vm65, %v883, %v850
    %v886 = vsel %vm73, %v884, 0
    %888 = vmatprep.subr.mxu0 0.0
    %889 = vmatpush1.msra.mxu0 0.0
    %890 = vmatprep.subr.mxu0 0.0
    %891 = vmatpush1.msra.mxu0 0.0
    %892 = vmatprep.subr.mxu0 0.0
    %893 = vmatpush1.msra.mxu0 0.0
    %894 = vmatprep.subr.mxu0 0.0
    %895 = vmatpush1.msra.mxu0 0.0
    %896 = vmatprep.subr.mxu0 0.0
    %897 = vmatpush1.msra.mxu0 0.0
    %898 = vmatprep.subr.mxu0 0.0
    %899 = vmatpush1.msra.mxu0 0.0
    %900 = vmatprep.subr.mxu0 0.0
    %901 = vmatpush1.msra.mxu0 0.0
    %902 = vmatprep.subr.mxu0 0.0
    %903 = vmatpush1.msra.mxu0 0.0
    %904 = vmatprep.subr.mxu0 0.0
    %905 = vmatpush1.msra.mxu0 0.0
    %906 = vmatprep.subr.mxu0 0.0
    %907 = vmatpush1.msra.mxu0 0.0
    %908 = vmatprep.subr.mxu0 0.0
    %909 = vmatpush1.msra.mxu0 0.0
    %910 = vmatprep.subr.mxu0 0.0
    %911 = vmatpush1.msra.mxu0 0.0
    %912 = vmatprep.subr.mxu0 0.0
    %913 = vmatpush1.msra.mxu0 0.0
    %914 = vmatprep.subr.mxu0 0.0
    %915 = vmatpush1.msra.mxu0 %v29
    %916 = vmatprep.subr.mxu0 0.0
    %917 = vmatpush1.msra.mxu0 %v28
    %918 = vmatprep.subr.mxu0 0.0
    %919 = vmatpush1.msra.mxu0 %v27
    %920 = vmatprep.subr.mxu0 0.0
    %921 = vmatpush2.msra.mxu0 0.0
    %922 = vmatprep.subr.mxu0 0.0
    %923 = vmatpush2.msra.mxu0 0.0
    %924 = vmatprep.subr.mxu0 0.0
    %925 = vmatpush2.msra.mxu0 0.0
    %926 = vmatprep.subr.mxu0 0.0
    %927 = vmatpush2.msra.mxu0 0.0
    %928 = vmatprep.subr.mxu0 0.0
    %929 = vmatpush2.msra.mxu0 0.0
    %930 = vmatprep.subr.mxu0 0.0
    %931 = vmatpush2.msra.mxu0 0.0
    %932 = vmatprep.subr.mxu0 0.0
    %933 = vmatpush2.msra.mxu0 0.0
    %934 = vmatprep.subr.mxu0 0.0
    %935 = vmatpush2.msra.mxu0 0.0
    %936 = vmatprep.subr.mxu0 0.0
    %937 = vmatpush2.msra.mxu0 0.0
    %938 = vmatprep.subr.mxu0 0.0
    %939 = vmatpush2.msra.mxu0 0.0
    %940 = vmatprep.subr.mxu0 0.0
    %941 = vmatpush2.msra.mxu0 0.0
    %942 = vmatprep.subr.mxu0 0.0
    %943 = vmatpush2.msra.mxu0 0.0
    %944 = vmatprep.subr.mxu0 0.0
    %945 = vmatpush2.msra.mxu0 0.0
    %946 = vmatprep.subr.mxu0 0.0
    %947 = vmatpush2.msra.mxu0 0.0
    %948 = vmatprep.subr.mxu0 0.0
    %949 = vmatpush2.msra.mxu0 0.0
    %950 = vmatprep.subr.mxu0 0.0
    %951 = vmatpush2.msra.mxu0 0.0
    %952 = vmatprep.mubr.f32.mxu0 0.0
    %953 = vmatmul.mubr.f32.gmra.mxu0 %v886
    %v954 = vpop.f32.mrf.mxu0
    %v955 = vadd.f32 %v71, %v954
    %v956 = vpop.f32.mrf.mxu0
    %957 = vdwg.mxu0
    %v958 = vxor.u32 %v955, 2147483648
    %v959 = vmul.f32 %v958, 1.442695
    %v960 = vpow.pop %v959
    %v961 = vadd.f32 %v960, 1.0
    %v962 = vrcp.pop %v961
    %v963 = vmul.f32 1.0, %v962
    %v964 = vtanh.pop %v955
    %v965 = vmul.f32 %v963, %v841
    %967 = vrot.lane.b32.xlu0 %v964, 96
    %v968 = vpop.permute.xlu0 %967
    %v970 = vmul.f32 %v963, %v968
    %972 = vrot.lane.b32.xlu0 %v970, 16
    %v973 = vpop.permute.xlu0 %972
    %v975 = vadd.f32 %v965, %v973
    %v976 = vtanh.pop %v975
    %978 = vrot.lane.b32.xlu0 %v976, 32
    %v979 = vpop.permute.xlu0 %978
    %v981 = vmul.f32 %v963, %v979
    %983 = vrot.lane.b32.xlu0 %v981, 88
    %v984 = vpop.permute.xlu0 %983
    %v986 = vsel %vm65, %v883, %v984
    %s987 = scalar_lea.vmem [#allocation2], 12
    %988 = vst.msk [vmem:[%s987] sm:$0x3] %vm176, %v986
    %v989 = vmul.f32 %v981, %v179
    %v990 = vmul.f32 %v975, %v183
    %992 = vrot.lane.b32.xlu0 %v990, 32
    %v993 = vpop.permute.xlu0 %992
    %v995 = vadd.f32 %v989, %v993
    %997 = vrot.lane.b32.xlu0 %v995, 80
    %v998 = vpop.permute.xlu0 %997
    %v1000 = vsel %vm195, %v998, 0.0
    %1001 = vadd.xlane.f32.xlu0 %v1000
    %v1002 = vpop.xlane.xlu0 %1001
    %v1003 = vadd.f32 %v24, %v1002
    %v1004 = vsel %vm51, %v1003, -inf
    %1005 = vmax.xlane.f32.xlu0 %v1004
    %v1006 = vpop.xlane.xlu0 %1005
    %v1007 = vsub.f32 %v1003, %v1006
    %v1008 = vmul.f32 %v1007, 1.442695
    %v1009 = vpow.pop %v1008
    %v1010 = vsel %vm51, %v1009, 0.0
    %1011 = vadd.xlane.f32.xlu0 %v1010
    %v1012 = vpop.xlane.xlu0 %1011
    %v1013 = vrcp.pop %v1012
    %v1014 = vmul.f32 %v1009, %v1013
    %s1015 = scalar_lea.vmem %s0, 14
    %v1016 = vld [vmem:[%s1015] sm:$0x3]
    %v1017 = vmul.f32 %v1014, %v1016
    %v1018 = vsel %vm65, %v1017, %v984
    %v1020 = vsel %vm73, %v1018, 0
    %1022 = vmatprep.subr.mxu0 0.0
    %1023 = vmatpush1.msra.mxu0 0.0
    %1024 = vmatprep.subr.mxu0 0.0
    %1025 = vmatpush1.msra.mxu0 0.0
    %1026 = vmatprep.subr.mxu0 0.0
    %1027 = vmatpush1.msra.mxu0 0.0
    %1028 = vmatprep.subr.mxu0 0.0
    %1029 = vmatpush1.msra.mxu0 0.0
    %1030 = vmatprep.subr.mxu0 0.0
    %1031 = vmatpush1.msra.mxu0 0.0
    %1032 = vmatprep.subr.mxu0 0.0
    %1033 = vmatpush1.msra.mxu0 0.0
    %1034 = vmatprep.subr.mxu0 0.0
    %1035 = vmatpush1.msra.mxu0 0.0
    %1036 = vmatprep.subr.mxu0 0.0
    %1037 = vmatpush1.msra.mxu0 0.0
    %1038 = vmatprep.subr.mxu0 0.0
    %1039 = vmatpush1.msra.mxu0 0.0
    %1040 = vmatprep.subr.mxu0 0.0
    %1041 = vmatpush1.msra.mxu0 0.0
    %1042 = vmatprep.subr.mxu0 0.0
    %1043 = vmatpush1.msra.mxu0 0.0
    %1044 = vmatprep.subr.mxu0 0.0
    %1045 = vmatpush1.msra.mxu0 0.0
    %1046 = vmatprep.subr.mxu0 0.0
    %1047 = vmatpush1.msra.mxu0 0.0
    %1048 = vmatprep.subr.mxu0 0.0
    %1049 = vmatpush1.msra.mxu0 %v29
    %1050 = vmatprep.subr.mxu0 0.0
    %1051 = vmatpush1.msra.mxu0 %v28
    %1052 = vmatprep.subr.mxu0 0.0
    %1053 = vmatpush1.msra.mxu0 %v27
    %1054 = vmatprep.subr.mxu0 0.0
    %1055 = vmatpush2.msra.mxu0 0.0
    %1056 = vmatprep.subr.mxu0 0.0
    %1057 = vmatpush2.msra.mxu0 0.0
    %1058 = vmatprep.subr.mxu0 0.0
    %1059 = vmatpush2.msra.mxu0 0.0
    %1060 = vmatprep.subr.mxu0 0.0
    %1061 = vmatpush2.msra.mxu0 0.0
    %1062 = vmatprep.subr.mxu0 0.0
    %1063 = vmatpush2.msra.mxu0 0.0
    %1064 = vmatprep.subr.mxu0 0.0
    %1065 = vmatpush2.msra.mxu0 0.0
    %1066 = vmatprep.subr.mxu0 0.0
    %1067 = vmatpush2.msra.mxu0 0.0
    %1068 = vmatprep.subr.mxu0 0.0
    %1069 = vmatpush2.msra.mxu0 0.0
    %1070 = vmatprep.subr.mxu0 0.0
    %1071 = vmatpush2.msra.mxu0 0.0
    %1072 = vmatprep.subr.mxu0 0.0
    %1073 = vmatpush2.msra.mxu0 0.0
    %1074 = vmatprep.subr.mxu0 0.0
    %1075 = vmatpush2.msra.mxu0 0.0
    %1076 = vmatprep.subr.mxu0 0.0
    %1077 = vmatpush2.msra.mxu0 0.0
    %1078 = vmatprep.subr.mxu0 0.0
    %1079 = vmatpush2.msra.mxu0 0.0
    %1080 = vmatprep.subr.mxu0 0.0
    %1081 = vmatpush2.msra.mxu0 0.0
    %1082 = vmatprep.subr.mxu0 0.0
    %1083 = vmatpush2.msra.mxu0 0.0
    %1084 = vmatprep.subr.mxu0 0.0
    %1085 = vmatpush2.msra.mxu0 0.0
    %1086 = vmatprep.mubr.f32.mxu0 0.0
    %1087 = vmatmul.mubr.f32.gmra.mxu0 %v1020
    %v1088 = vpop.f32.mrf.mxu0
    %v1089 = vadd.f32 %v71, %v1088
    %v1090 = vpop.f32.mrf.mxu0
    %1091 = vdwg.mxu0
    %v1092 = vxor.u32 %v1089, 2147483648
    %v1093 = vmul.f32 %v1092, 1.442695
    %v1094 = vpow.pop %v1093
    %v1095 = vadd.f32 %v1094, 1.0
    %v1096 = vrcp.pop %v1095
    %v1097 = vmul.f32 1.0, %v1096
    %v1098 = vtanh.pop %v1089
    %v1099 = vmul.f32 %v1097, %v975
    %1101 = vrot.lane.b32.xlu0 %v1098, 96
    %v1102 = vpop.permute.xlu0 %1101
    %v1104 = vmul.f32 %v1097, %v1102
    %1106 = vrot.lane.b32.xlu0 %v1104, 16
    %v1107 = vpop.permute.xlu0 %1106
    %v1109 = vadd.f32 %v1099, %v1107
    %v1110 = vtanh.pop %v1109
    %1112 = vrot.lane.b32.xlu0 %v1110, 32
    %v1113 = vpop.permute.xlu0 %1112
    %v1115 = vmul.f32 %v1097, %v1113
    %1117 = vrot.lane.b32.xlu0 %v1115, 88
    %v1118 = vpop.permute.xlu0 %1117
    %v1120 = vsel %vm65, %v1017, %v1118
    %s1121 = scalar_lea.vmem [#allocation2], 14
    %1122 = vst.msk [vmem:[%s1121] sm:$0x3] %vm176, %v1120
    %v1123 = vmul.f32 %v1115, %v179
    %v1124 = vmul.f32 %v1109, %v183
    %1126 = vrot.lane.b32.xlu0 %v1124, 32
    %v1127 = vpop.permute.xlu0 %1126
    %v1129 = vadd.f32 %v1123, %v1127
    %1131 = vrot.lane.b32.xlu0 %v1129, 80
    %v1132 = vpop.permute.xlu0 %1131
    %v1134 = vsel %vm195, %v1132, 0.0
    %1135 = vadd.xlane.f32.xlu0 %v1134
    %v1136 = vpop.xlane.xlu0 %1135
    %v1137 = vadd.f32 %v24, %v1136
    %v1138 = vsel %vm51, %v1137, -inf
    %1139 = vmax.xlane.f32.xlu0 %v1138
    %v1140 = vpop.xlane.xlu0 %1139
    %v1141 = vsub.f32 %v1137, %v1140
    %v1142 = vmul.f32 %v1141, 1.442695
    %v1143 = vpow.pop %v1142
    %v1144 = vsel %vm51, %v1143, 0.0
    %1145 = vadd.xlane.f32.xlu0 %v1144
    %v1146 = vpop.xlane.xlu0 %1145
    %v1147 = vrcp.pop %v1146
    %v1148 = vmul.f32 %v1143, %v1147
    %s1149 = scalar_lea.vmem %s0, 16
    %v1150 = vld [vmem:[%s1149] sm:$0x3]
    %v1151 = vmul.f32 %v1148, %v1150
    %v1152 = vsel %vm65, %v1151, %v1118
    %v1154 = vsel %vm73, %v1152, 0
    %1156 = vmatprep.subr.mxu0 0.0
    %1157 = vmatpush1.msra.mxu0 0.0
    %1158 = vmatprep.subr.mxu0 0.0
    %1159 = vmatpush1.msra.mxu0 0.0
    %1160 = vmatprep.subr.mxu0 0.0
    %1161 = vmatpush1.msra.mxu0 0.0
    %1162 = vmatprep.subr.mxu0 0.0
    %1163 = vmatpush1.msra.mxu0 0.0
    %1164 = vmatprep.subr.mxu0 0.0
    %1165 = vmatpush1.msra.mxu0 0.0
    %1166 = vmatprep.subr.mxu0 0.0
    %1167 = vmatpush1.msra.mxu0 0.0
    %1168 = vmatprep.subr.mxu0 0.0
    %1169 = vmatpush1.msra.mxu0 0.0
    %1170 = vmatprep.subr.mxu0 0.0
    %1171 = vmatpush1.msra.mxu0 0.0
    %1172 = vmatprep.subr.mxu0 0.0
    %1173 = vmatpush1.msra.mxu0 0.0
    %1174 = vmatprep.subr.mxu0 0.0
    %1175 = vmatpush1.msra.mxu0 0.0
    %1176 = vmatprep.subr.mxu0 0.0
    %1177 = vmatpush1.msra.mxu0 0.0
    %1178 = vmatprep.subr.mxu0 0.0
    %1179 = vmatpush1.msra.mxu0 0.0
    %1180 = vmatprep.subr.mxu0 0.0
    %1181 = vmatpush1.msra.mxu0 0.0
    %1182 = vmatprep.subr.mxu0 0.0
    %1183 = vmatpush1.msra.mxu0 %v29
    %1184 = vmatprep.subr.mxu0 0.0
    %1185 = vmatpush1.msra.mxu0 %v28
    %1186 = vmatprep.subr.mxu0 0.0
    %1187 = vmatpush1.msra.mxu0 %v27
    %1188 = vmatprep.subr.mxu0 0.0
    %1189 = vmatpush2.msra.mxu0 0.0
    %1190 = vmatprep.subr.mxu0 0.0
    %1191 = vmatpush2.msra.mxu0 0.0
    %1192 = vmatprep.subr.mxu0 0.0
    %1193 = vmatpush2.msra.mxu0 0.0
    %1194 = vmatprep.subr.mxu0 0.0
    %1195 = vmatpush2.msra.mxu0 0.0
    %1196 = vmatprep.subr.mxu0 0.0
    %1197 = vmatpush2.msra.mxu0 0.0
    %1198 = vmatprep.subr.mxu0 0.0
    %1199 = vmatpush2.msra.mxu0 0.0
    %1200 = vmatprep.subr.mxu0 0.0
    %1201 = vmatpush2.msra.mxu0 0.0
    %1202 = vmatprep.subr.mxu0 0.0
    %1203 = vmatpush2.msra.mxu0 0.0
    %1204 = vmatprep.subr.mxu0 0.0
    %1205 = vmatpush2.msra.mxu0 0.0
    %1206 = vmatprep.subr.mxu0 0.0
    %1207 = vmatpush2.msra.mxu0 0.0
    %1208 = vmatprep.subr.mxu0 0.0
    %1209 = vmatpush2.msra.mxu0 0.0
    %1210 = vmatprep.subr.mxu0 0.0
    %1211 = vmatpush2.msra.mxu0 0.0
    %1212 = vmatprep.subr.mxu0 0.0
    %1213 = vmatpush2.msra.mxu0 0.0
    %1214 = vmatprep.subr.mxu0 0.0
    %1215 = vmatpush2.msra.mxu0 0.0
    %1216 = vmatprep.subr.mxu0 0.0
    %1217 = vmatpush2.msra.mxu0 0.0
    %1218 = vmatprep.subr.mxu0 0.0
    %1219 = vmatpush2.msra.mxu0 0.0
    %1220 = vmatprep.mubr.f32.mxu0 0.0
    %1221 = vmatmul.mubr.f32.gmra.mxu0 %v1154
    %v1222 = vpop.f32.mrf.mxu0
    %v1223 = vadd.f32 %v71, %v1222
    %v1224 = vpop.f32.mrf.mxu0
    %1225 = vdwg.mxu0
    %v1226 = vxor.u32 %v1223, 2147483648
    %v1227 = vmul.f32 %v1226, 1.442695
    %v1228 = vpow.pop %v1227
    %v1229 = vadd.f32 %v1228, 1.0
    %v1230 = vrcp.pop %v1229
    %v1231 = vmul.f32 1.0, %v1230
    %v1232 = vtanh.pop %v1223
    %v1233 = vmul.f32 %v1231, %v1109
    %1235 = vrot.lane.b32.xlu0 %v1232, 96
    %v1236 = vpop.permute.xlu0 %1235
    %v1238 = vmul.f32 %v1231, %v1236
    %1240 = vrot.lane.b32.xlu0 %v1238, 16
    %v1241 = vpop.permute.xlu0 %1240
    %v1243 = vadd.f32 %v1233, %v1241
    %v1244 = vtanh.pop %v1243
    %1246 = vrot.lane.b32.xlu0 %v1244, 32
    %v1247 = vpop.permute.xlu0 %1246
    %v1249 = vmul.f32 %v1231, %v1247
    %1251 = vrot.lane.b32.xlu0 %v1249, 88
    %v1252 = vpop.permute.xlu0 %1251
    %v1254 = vsel %vm65, %v1151, %v1252
    %s1255 = scalar_lea.vmem [#allocation2], 16
    %1256 = vst.msk [vmem:[%s1255] sm:$0x3] %vm176, %v1254
    // Predicated region
    $region26: #{tpu_custom_call.1} parent=1 // pred_check
      _
    $region27: #{tpu_custom_call.1} parent=1 // pred_check_branch
      %1258 = sbr.rel (0) target = $region29
    $region28: #{tpu_custom_call.1} parent=1 // pred_region
      %s1260 = ssub.s32 288, 288
      %1261 = vsyncadd [#allocation3], %s1260
      %s1262 = sshll.u32 [#allocation2], 4
      %s1263 = int_to_ptr.vmem [resolvable:$true] %s1262
      %1268 = dma.vmem_to_hbm [thread:$0]  %s1263, 288, %s6, [#allocation3], 32, 32, 2
    $region29: #{tpu_custom_call.1} parent=1 // pred_fallthru
      _
    // Predicated region
    $region30: #{tpu_custom_call.1} parent=1 // pred_check
      _
    $region31: #{tpu_custom_call.1} parent=1 // pred_check_branch
      %1270 = sbr.rel (0) target = $region33
    $region32: #{tpu_custom_call.1} parent=1 // pred_region
      %1271 = dma.done [#allocation3], 288
    $region33: #{tpu_custom_call.1} parent=1 // pred_fallthru
      _
    %1272 = vsyncpa [#allocation3], 1

</llo_original>
